<compile_context>
chip_gen: v5e
topology: v5e:2x2
jax: 0.10.0
libtpu: 0.0.40
codegen_flags: <defaults>
</compile_context>

<pallas_src>
import functools

import jax
import jax.numpy as jnp
from jax import lax
from jax.experimental import pallas as pl
from jax.experimental.pallas import tpu as pltpu


# ----------------------------------------------------------------------------- kernel
def gruie_gru_fc_kernel(
    ids_ref,     # [T*Bp, 1]  int32 token ids, time-major, batch padded to Bp
    mask_ref,    # [T*Bp, H]  f32 validity mask, lane-dense (1.0 while t < length)
    tabf_ref,    # [Vp, 3H]   fwd lookup table: emb @ [W_ir|W_iz|W_in] + folded biases
    tabb_ref,    # [Vp, 3H]   bwd lookup table
    whhf_ref,    # [H, 3H]    fwd recurrent weight, gate-major (r|z|n)
    whhb_ref,    # [H, 3H]    bwd recurrent weight
    bhnf_ref,    # [1, H]     fwd b_hn (must stay inside r * (...))
    bhnb_ref,    # [1, H]     bwd b_hn
    wfc_ref,     # [2H, C]    classifier weight, rows = [fwd ; bwd]
    bfc_ref,     # [1, C]     classifier bias
    logits_ref,  # [T*Bp, C]  output
    gif_ref,     # scratch [T*Bp, 3H] fwd input projections (fully overwritten below)
    gib_ref,     # scratch [T*Bp, 3H] bwd input projections (fully overwritten below)
    seq_ref,     # scratch [T*Bp, 2H] GRU outputs [fwd | bwd], fully overwritten
    *, T, Bp,
):
    TB, H = mask_ref.shape
    Vp = tabf_ref.shape[0]
    H2, H3 = 2 * H, 3 * H

    # ---- embedding lookup + input projection + bias add fused into one matmul per
    #      direction:  gi = onehot(ids) @ (emb @ W_ih + b)  ==  x_t @ W_ih + b
    #      (the one-hot has exactly one 1.0 per row, so this is an exact row select).
    ids = ids_ref[...]                                              # [TB, 1] int32
    vocab_lane = lax.broadcasted_iota(jnp.int32, (TB, Vp), 1)
    onehot = (vocab_lane == ids).astype(jnp.float32)                # [TB, Vp]
    gif_ref[...] = jnp.dot(onehot, tabf_ref[...], preferred_element_type=jnp.float32)
    gib_ref[...] = jnp.dot(onehot, tabb_ref[...], preferred_element_type=jnp.float32)

    whh_f = whhf_ref[...]
    whh_b = whhb_ref[...]
    bhn_f = bhnf_ref[...]
    bhn_b = bhnb_ref[...]

    h_f = jnp.zeros((Bp, H), jnp.float32)
    h_b = jnp.zeros((Bp, H), jnp.float32)

    def cell(gi, gh, bhn, m, h):
        # PyTorch GRU cell (gate order r, z, n); sigmoid via the exact identity
        # sigmoid(x) = 0.5*(1 + tanh(x/2)) so each gate costs a single EUP op.
        r = 0.5 + 0.5 * jnp.tanh(0.5 * (gi[:, 0:H] + gh[:, 0:H]))
        omz = 0.5 - 0.5 * jnp.tanh(0.5 * (gi[:, H:H2] + gh[:, H:H2]))   # 1 - z
        # off-critical-path pre-work (independent of n's tanh):
        mz = m * omz
        mh = m * h
        n = jnp.tanh(gi[:, H2:H3] + r * (gh[:, H2:H3] + bhn))
        mzd = mz * (n - h)
        #   carried hidden : h + m*(1-z)*(n-h)   (frozen where mask == 0)
        #   masked output  : m*h' = m*h + m*(1-z)*(n-h)   (zero where mask == 0)
        return h + mzd, mh + mzd

    # ---- fully unrolled recurrence (T static & small): forward walks t = 0..T-1,
    #      backward walks T-1..0; both update every step from aligned row blocks.
    for t in range(T):
        tb = T - 1 - t
        rf = slice(t * Bp, (t + 1) * Bp)      # sublane-aligned row block (time t)
        rb = slice(tb * Bp, (tb + 1) * Bp)    # sublane-aligned row block (time T-1-t)

        if t == 0:
            gh_f = jnp.zeros((Bp, H3), jnp.float32)   # both hidden states start at 0
            gh_b = jnp.zeros((Bp, H3), jnp.float32)
        else:
            gh_f = jnp.dot(h_f, whh_f, preferred_element_type=jnp.float32)
            gh_b = jnp.dot(h_b, whh_b, preferred_element_type=jnp.float32)

        h_f, out_f = cell(gif_ref[rf, :], gh_f, bhn_f, mask_ref[rf, :], h_f)
        h_b, out_b = cell(gib_ref[rb, :], gh_b, bhn_b, mask_ref[rb, :], h_b)

        seq_ref[rf, 0:H] = out_f
        seq_ref[rb, H:H2] = out_b

    # ---- classifier over all timesteps at once: one matmul + one full store
    # TODO(synk): at production T*B, pad C up to 128 lanes if vst.msk binds here.
    logits_ref[...] = (
        jnp.dot(seq_ref[...], wfc_ref[...], preferred_element_type=jnp.float32)
        + bfc_ref[...]
    )


# ----------------------------------------------------------------------------- wrapper
def _fuse_params(params, Vp):
    """Parameter-only preprocessing (concats + one tiny matmul per direction)."""
    E = params["wih_f"].shape[1]
    V = params["embedding"].shape[0]
    hp = lax.Precision.HIGHEST

    def one_dir(wih, whh, bih, bhh):
        wih_cat = jnp.concatenate([wih[0], wih[1], wih[2]], axis=1)          # [E, 3H]
        whh_cat = jnp.concatenate([whh[0], whh[1], whh[2]], axis=1)          # [H, 3H]
        # fold b_ih + b_hh for r/z and b_ih for n; b_hn stays inside the loop
        bi = jnp.concatenate([bih[0] + bhh[0], bih[1] + bhh[1], bih[2]], axis=1)
        return wih_cat, whh_cat, bi, bhh[2]

    wih_f, whh_f, bi_f, bhn_f = one_dir(params["wih_f"], params["whh_f"],
                                        params["bih_f"], params["bhh_f"])
    wih_b, whh_b, bi_b, bhn_b = one_dir(params["wih_b"], params["whh_b"],
                                        params["bih_b"], params["bhh_b"])

    emb_p = jnp.zeros((Vp, E), jnp.float32).at[:V].set(params["embedding"])
    # lookup tables: row v = emb[v] @ W_ih + folded biases, so the in-kernel one-hot
    # matmul is embedding lookup + input projection + bias add in a single MXU pass.
    tab_f = jnp.dot(emb_p, wih_f, precision=hp) + bi_f                       # [Vp, 3H]
    tab_b = jnp.dot(emb_p, wih_b, precision=hp) + bi_b                       # [Vp, 3H]
    wfc = jnp.concatenate([params["wfc_f"], params["wfc_b"]], axis=0)        # [2H, C]
    return tab_f, tab_b, whh_f, whh_b, bhn_f, bhn_b, wfc, params["bfc"]


def gru_fc_pallas(padded_input, input_lengths, params):
    """padded_input [B, T] int32, input_lengths [B] -> logits [T, B, C] (time-major)."""
    B, T = padded_input.shape
    H = params["whh_f"].shape[-1]
    C = params["bfc"].shape[-1]
    V = params["embedding"].shape[0]

    Bp = max(8, ((B + 7) // 8) * 8)   # sublane-align the batch
    Vp = ((V + 7) // 8) * 8           # pad vocab (K dim of the one-hot matmul)

    tab_f, tab_b, whh_f, whh_b, bhn_f, bhn_b, wfc, bfc = _fuse_params(params, Vp)

    # time-major token ids, batch padded with the PAD row (its mask is all-zero)
    ids_p = jnp.zeros((Bp, T), jnp.int32).at[:B].set(padded_input.astype(jnp.int32))
    ids_tm = jnp.transpose(ids_p, (1, 0)).reshape(T * Bp, 1)
    len_p = jnp.zeros((Bp,), jnp.int32).at[:B].set(input_lengths.astype(jnp.int32))
    mask = (jnp.arange(T)[:, None] < len_p[None, :]).astype(jnp.float32)     # [T, Bp]
    mask_full = jnp.broadcast_to(mask.reshape(T * Bp, 1), (T * Bp, H))       # lane-dense

    vmem = pl.BlockSpec(memory_space=pltpu.MemorySpace.VMEM)
    kernel = functools.partial(gruie_gru_fc_kernel, T=T, Bp=Bp)
    logits_flat = pl.pallas_call(
        kernel,
        out_shape=jax.ShapeDtypeStruct((T * Bp, C), jnp.float32),
        in_specs=[vmem] * 10,
        out_specs=vmem,
        scratch_shapes=[
            pltpu.VMEM((T * Bp, 3 * H), jnp.float32),   # gi fwd
            pltpu.VMEM((T * Bp, 3 * H), jnp.float32),   # gi bwd
            pltpu.VMEM((T * Bp, 2 * H), jnp.float32),   # GRU outputs [fwd | bwd]
        ],
    )(ids_tm, mask_full, tab_f, tab_b, whh_f, whh_b, bhn_f, bhn_b, wfc, bfc)

    return logits_flat.reshape(T, Bp, C)[:, :B, :]       # drop batch padding


def crf_viterbi_decode(emissions, start_trans, end_trans, trans):
    """torchcrf CRF.decode with no mask (GRUIE.forward passes none, so every timestep —
    including padded ones — participates in Viterbi, exactly like the PyTorch module)."""
    B, T, C = emissions.shape
    score = start_trans[None, :] + emissions[:, 0]                        # [B, C]

    def step(score, emis_t):
        nxt = score[:, :, None] + trans[None, :, :] + emis_t[:, None, :]  # [B, Cp, Cn]
        best_prev = jnp.argmax(nxt, axis=1)                               # [B, C]
        return jnp.max(nxt, axis=1), best_prev

    emis_rest = jnp.transpose(emissions[:, 1:], (1, 0, 2))                # [T-1, B, C]
    score, history = lax.scan(step, score, emis_rest)
    score = score + end_trans[None, :]
    last_tag = jnp.argmax(score, axis=1).astype(jnp.int32)                # [B]

    def back_step(tag, hist_t):
        prev = jnp.take_along_axis(hist_t, tag[:, None], axis=1)[:, 0].astype(jnp.int32)
        return prev, prev

    _, tags_prefix = lax.scan(back_step, last_tag, history, reverse=True)   # [T-1, B]
    tags_tm = jnp.concatenate([tags_prefix, last_tag[None, :]], axis=0)     # [T, B]
    return jnp.transpose(tags_tm, (1, 0))                                   # [B, T]


def gruie_forward(padded_input, input_lengths, params):
    """Full GRUIE.forward: embedding -> (packed) BiGRU -> fc -> CRF decode."""
    logits_tm = gru_fc_pallas(padded_input, input_lengths, params)        # [T, B, C]
    logits = jnp.transpose(logits_tm, (1, 0, 2))                          # [B, T, C]
    # TODO(synk): CRF Viterbi backtracking is data-dependent gather/argmax over a tiny
    # tag set; done in plain JAX (lax.scan) rather than Pallas.
    tags = crf_viterbi_decode(
        logits, params["crf_start"], params["crf_end"], params["crf_trans"]
    )
    return tags, logits


# ----------------------------------------------------------------------------- pure-JAX reference (for checking)
def gru_fc_reference(x_tm, mask_t, params):
    T, B, _ = x_tm.shape
    H = params["whh_f"].shape[-1]

    def cell(x_t, h, wih, whh, bih, bhh):
        gi = [x_t @ wih[g] + bih[g] for g in range(3)]
        gh = [h @ whh[g] + bhh[g] for g in range(3)]
        r = jax.nn.sigmoid(gi[0] + gh[0])
        z = jax.nn.sigmoid(gi[1] + gh[1])
        n = jnp.tanh(gi[2] + r * gh[2])
        return (1.0 - z) * n + z * h

    def run_dir(xs, ms, wih, whh, bih, bhh):
        def step(h, xm):
            x_t, m_t = xm
            h_new = cell(x_t, h, wih, whh, bih, bhh)
            h = m_t * h_new + (1.0 - m_t) * h
            return h, m_t * h_new
        _, outs = lax.scan(step, jnp.zeros((B, H), jnp.float32), (xs, ms))
        return outs

    out_f = run_dir(x_tm, mask_t, params["wih_f"], params["whh_f"],
                    params["bih_f"], params["bhh_f"])
    out_b = run_dir(x_tm[::-1], mask_t[::-1], params["wih_b"], params["whh_b"],
                    params["bih_b"], params["bhh_b"])[::-1]
    return out_f @ params["wfc_f"] + out_b @ params["wfc_b"] + params["bfc"]


# ----------------------------------------------------------------------------- main
def init_params(key, V, E, H, C, pad_idx):
    ks = jax.random.split(key, 16)
    kgru = 1.0 / jnp.sqrt(jnp.float32(H))
    kfc = 1.0 / jnp.sqrt(jnp.float32(2 * H))

    emb = jax.random.normal(ks[0], (V, E), jnp.float32)
    emb = emb.at[pad_idx].set(0.0)  # padding_idx row is zero

    def u(k, shape, a):
        return jax.random.uniform(k, shape, jnp.float32, minval=-a, maxval=a)

    return {
        "embedding": emb,
        "wih_f": u(ks[1], (3, E, H), kgru), "whh_f": u(ks[2], (3, H, H), kgru),
        "bih_f": u(ks[3], (3, 1, H), kgru), "bhh_f": u(ks[4], (3, 1, H), kgru),
        "wih_b": u(ks[5], (3, E, H), kgru), "whh_b": u(ks[6], (3, H, H), kgru),
        "bih_b": u(ks[7], (3, 1, H), kgru), "bhh_b": u(ks[8], (3, 1, H), kgru),
        "wfc_f": u(ks[9], (H, C), kfc), "wfc_b": u(ks[10], (H, C), kfc),
        "bfc": u(ks[11], (1, C), kfc),
        "crf_start": u(ks[12], (C,), 0.1),
        "crf_end": u(ks[13], (C,), 0.1),
        "crf_trans": u(ks[14], (C, C), 0.1),
    }


if __name__ == "__main__":
    # Module config (small): num_embeddings=50, embedding_dim=32, hid_dim=32,
    # num_layers=1, bidirectional=True, num_class=8, dropout=0.0, PAD_IDX=0, use_crf=True
    V, E, H, C, PAD_IDX = 50, 32, 32, 8, 0
    B, T = 2, 8

    key = jax.random.PRNGKey(0)
    kp, kt = jax.random.split(key)
    params = init_params(kp, V, E, H, C, PAD_IDX)

    input_lengths = jnp.array([8, 5], dtype=jnp.int32)
    tokens = jax.random.randint(kt, (B, T), 1, V, dtype=jnp.int32)
    valid = jnp.arange(T)[None, :] < input_lengths[:, None]
    padded_input = jnp.where(valid, tokens, PAD_IDX)            # [B, T] with PAD_IDX padding

    tags, logits = gruie_forward(padded_input, input_lengths, params)
    tags = jax.block_until_ready(tags)
    logits = jax.block_until_ready(logits)

    # correctness check of the Pallas hot path against a pure-JAX reference
    x_tm = jnp.transpose(params["embedding"][padded_input], (1, 0, 2)).astype(jnp.float32)
    mask_t = (jnp.arange(T)[:, None] < input_lengths[None, :]).astype(jnp.float32)[:, :, None]
    ref_logits = jnp.transpose(gru_fc_reference(x_tm, mask_t, params), (1, 0, 2))
    assert logits.shape == (B, T, C)
    assert tags.shape == (B, T) and tags.dtype == jnp.int32
    assert bool(jnp.all(jnp.isfinite(logits)))
    assert bool(jnp.allclose(logits, ref_logits, atol=1e-3, rtol=1e-3))

    print("KERNEL_OK")
</pallas_src>

<mosaic_0001>
module attributes {stable_mosaic.version = 11 : i64} {
  func.func @gruie_gru_fc_kernel(%arg0: memref<64x1xi32, #tpu.memory_space<vmem>>, %arg1: memref<64x32xf32, #tpu.memory_space<vmem>>, %arg2: memref<56x96xf32, #tpu.memory_space<vmem>>, %arg3: memref<56x96xf32, #tpu.memory_space<vmem>>, %arg4: memref<32x96xf32, #tpu.memory_space<vmem>>, %arg5: memref<32x96xf32, #tpu.memory_space<vmem>>, %arg6: memref<1x32xf32, #tpu.memory_space<vmem>>, %arg7: memref<1x32xf32, #tpu.memory_space<vmem>>, %arg8: memref<64x8xf32, #tpu.memory_space<vmem>>, %arg9: memref<1x8xf32, #tpu.memory_space<vmem>>, %arg10: memref<64x8xf32, #tpu.memory_space<vmem>>, %arg11: memref<64x96xf32, #tpu.memory_space<vmem>>, %arg12: memref<64x96xf32, #tpu.memory_space<vmem>>, %arg13: memref<64x64xf32, #tpu.memory_space<vmem>>) attributes {dimension_semantics = [], scalar_prefetch = 0 : i64, scratch_operands = 3 : i64, tpu.core_type = #tpu.core_type<tc>} {
    %c0 = arith.constant 0 : index
    %c0_0 = arith.constant 0 : index
    %0 = vector.load %arg0[%c0, %c0_0] : memref<64x1xi32, #tpu.memory_space<vmem>>, vector<64x1xi32>
    %1 = tpu.iota {dimensions = array<i32: 1>} : vector<64x56xi32>
    %2 = vector.broadcast %0 : vector<64x1xi32> to vector<64x56xi32>
    %3 = arith.cmpi eq, %1, %2 : vector<64x56xi32>
    %4 = arith.extui %3 : vector<64x56xi1> to vector<64x56xi32>
    %5 = arith.sitofp %4 : vector<64x56xi32> to vector<64x56xf32>
    %c0_1 = arith.constant 0 : index
    %c0_2 = arith.constant 0 : index
    %6 = vector.load %arg2[%c0_1, %c0_2] : memref<56x96xf32, #tpu.memory_space<vmem>>, vector<56x96xf32>
    %cst = arith.constant dense<0.000000e+00> : vector<64x96xf32>
    %7 = tpu.matmul %5, %6, %cst {dimension_numbers = #tpu.dot_dimension_numbers<[1], [0], [0], [1], [0, 0, 1, 1], [], []>} : vector<64x56xf32>, vector<56x96xf32>, vector<64x96xf32> -> vector<64x96xf32>
    %c0_3 = arith.constant 0 : index
    %c0_4 = arith.constant 0 : index
    %8 = vector.load %arg11[%c0_3, %c0_4] : memref<64x96xf32, #tpu.memory_space<vmem>>, vector<64x96xf32>
    tpu.vector_store %arg11[%c0_3, %c0_4], %7 {strides = array<i32>} : memref<64x96xf32, #tpu.memory_space<vmem>>, vector<64x96xf32>,
    %c0_5 = arith.constant 0 : index
    %c0_6 = arith.constant 0 : index
    %9 = vector.load %arg3[%c0_5, %c0_6] : memref<56x96xf32, #tpu.memory_space<vmem>>, vector<56x96xf32>
    %cst_7 = arith.constant dense<0.000000e+00> : vector<64x96xf32>
    %10 = tpu.matmul %5, %9, %cst_7 {dimension_numbers = #tpu.dot_dimension_numbers<[1], [0], [0], [1], [0, 0, 1, 1], [], []>} : vector<64x56xf32>, vector<56x96xf32>, vector<64x96xf32> -> vector<64x96xf32>
    %c0_8 = arith.constant 0 : index
    %c0_9 = arith.constant 0 : index
    %11 = vector.load %arg12[%c0_8, %c0_9] : memref<64x96xf32, #tpu.memory_space<vmem>>, vector<64x96xf32>
    tpu.vector_store %arg12[%c0_8, %c0_9], %10 {strides = array<i32>} : memref<64x96xf32, #tpu.memory_space<vmem>>, vector<64x96xf32>,
    %c0_10 = arith.constant 0 : index
    %c0_11 = arith.constant 0 : index
    %12 = vector.load %arg4[%c0_10, %c0_11] : memref<32x96xf32, #tpu.memory_space<vmem>>, vector<32x96xf32>
    %c0_12 = arith.constant 0 : index
    %c0_13 = arith.constant 0 : index
    %13 = vector.load %arg5[%c0_12, %c0_13] : memref<32x96xf32, #tpu.memory_space<vmem>>, vector<32x96xf32>
    %c0_14 = arith.constant 0 : index
    %c0_15 = arith.constant 0 : index
    %14 = vector.load %arg6[%c0_14, %c0_15] : memref<1x32xf32, #tpu.memory_space<vmem>>, vector<1x32xf32>
    %c0_16 = arith.constant 0 : index
    %c0_17 = arith.constant 0 : index
    %15 = vector.load %arg7[%c0_16, %c0_17] : memref<1x32xf32, #tpu.memory_space<vmem>>, vector<1x32xf32>
    %cst_18 = arith.constant 0.000000e+00 : f32
    %16 = vector.broadcast %cst_18 : f32 to vector<8x32xf32>
    %cst_19 = arith.constant 0.000000e+00 : f32
    %17 = vector.broadcast %cst_19 : f32 to vector<8x32xf32>
    %cst_20 = arith.constant 0.000000e+00 : f32
    %18 = vector.broadcast %cst_20 : f32 to vector<8x96xf32>
    %cst_21 = arith.constant 0.000000e+00 : f32
    %19 = vector.broadcast %cst_21 : f32 to vector<8x96xf32>
    %c0_22 = arith.constant 0 : index
    %c0_23 = arith.constant 0 : index
    %20 = vector.load %arg11[%c0_22, %c0_23] : memref<64x96xf32, #tpu.memory_space<vmem>>, vector<8x96xf32>
    %c0_24 = arith.constant 0 : index
    %c0_25 = arith.constant 0 : index
    %21 = vector.load %arg1[%c0_24, %c0_25] : memref<64x32xf32, #tpu.memory_space<vmem>>, vector<8x32xf32>
    %22 = vector.extract_strided_slice %20 {offsets = [0, 0], sizes = [8, 32], strides = [1, 1]} : vector<8x96xf32> to vector<8x32xf32>
    %23 = vector.extract_strided_slice %18 {offsets = [0, 0], sizes = [8, 32], strides = [1, 1]} : vector<8x96xf32> to vector<8x32xf32>
    %24 = arith.addf %22, %23 : vector<8x32xf32>
    %cst_26 = arith.constant 5.000000e-01 : f32
    %25 = vector.broadcast %cst_26 : f32 to vector<8x32xf32>
    %26 = arith.mulf %25, %24 : vector<8x32xf32>
    %27 = math.tanh %26 : vector<8x32xf32>
    %cst_27 = arith.constant 5.000000e-01 : f32
    %28 = vector.broadcast %cst_27 : f32 to vector<8x32xf32>
    %29 = arith.mulf %28, %27 : vector<8x32xf32>
    %cst_28 = arith.constant 5.000000e-01 : f32
    %30 = vector.broadcast %cst_28 : f32 to vector<8x32xf32>
    %31 = arith.addf %30, %29 : vector<8x32xf32>
    %32 = vector.extract_strided_slice %20 {offsets = [0, 32], sizes = [8, 32], strides = [1, 1]} : vector<8x96xf32> to vector<8x32xf32>
    %33 = vector.extract_strided_slice %18 {offsets = [0, 32], sizes = [8, 32], strides = [1, 1]} : vector<8x96xf32> to vector<8x32xf32>
    %34 = arith.addf %32, %33 : vector<8x32xf32>
    %cst_29 = arith.constant 5.000000e-01 : f32
    %35 = vector.broadcast %cst_29 : f32 to vector<8x32xf32>
    %36 = arith.mulf %35, %34 : vector<8x32xf32>
    %37 = math.tanh %36 : vector<8x32xf32>
    %cst_30 = arith.constant 5.000000e-01 : f32
    %38 = vector.broadcast %cst_30 : f32 to vector<8x32xf32>
    %39 = arith.mulf %38, %37 : vector<8x32xf32>
    %cst_31 = arith.constant 5.000000e-01 : f32
    %40 = vector.broadcast %cst_31 : f32 to vector<8x32xf32>
    %41 = arith.subf %40, %39 : vector<8x32xf32>
    %42 = arith.mulf %21, %41 : vector<8x32xf32>
    %43 = arith.mulf %21, %16 : vector<8x32xf32>
    %44 = vector.extract_strided_slice %20 {offsets = [0, 64], sizes = [8, 32], strides = [1, 1]} : vector<8x96xf32> to vector<8x32xf32>
    %45 = vector.extract_strided_slice %18 {offsets = [0, 64], sizes = [8, 32], strides = [1, 1]} : vector<8x96xf32> to vector<8x32xf32>
    %46 = vector.broadcast %14 : vector<1x32xf32> to vector<8x32xf32>
    %47 = arith.addf %45, %46 : vector<8x32xf32>
    %48 = arith.mulf %31, %47 : vector<8x32xf32>
    %49 = arith.addf %44, %48 : vector<8x32xf32>
    %50 = math.tanh %49 : vector<8x32xf32>
    %51 = arith.subf %50, %16 : vector<8x32xf32>
    %52 = arith.mulf %42, %51 : vector<8x32xf32>
    %53 = arith.addf %16, %52 : vector<8x32xf32>
    %54 = arith.addf %43, %52 : vector<8x32xf32>
    %c56 = arith.constant 56 : index
    %c0_32 = arith.constant 0 : index
    %55 = vector.load %arg12[%c56, %c0_32] : memref<64x96xf32, #tpu.memory_space<vmem>>, vector<8x96xf32>
    %c56_33 = arith.constant 56 : index
    %c0_34 = arith.constant 0 : index
    %56 = vector.load %arg1[%c56_33, %c0_34] : memref<64x32xf32, #tpu.memory_space<vmem>>, vector<8x32xf32>
    %57 = vector.extract_strided_slice %55 {offsets = [0, 0], sizes = [8, 32], strides = [1, 1]} : vector<8x96xf32> to vector<8x32xf32>
    %58 = vector.extract_strided_slice %19 {offsets = [0, 0], sizes = [8, 32], strides = [1, 1]} : vector<8x96xf32> to vector<8x32xf32>
    %59 = arith.addf %57, %58 : vector<8x32xf32>
    %cst_35 = arith.constant 5.000000e-01 : f32
    %60 = vector.broadcast %cst_35 : f32 to vector<8x32xf32>
    %61 = arith.mulf %60, %59 : vector<8x32xf32>
    %62 = math.tanh %61 : vector<8x32xf32>
    %cst_36 = arith.constant 5.000000e-01 : f32
    %63 = vector.broadcast %cst_36 : f32 to vector<8x32xf32>
    %64 = arith.mulf %63, %62 : vector<8x32xf32>
    %cst_37 = arith.constant 5.000000e-01 : f32
    %65 = vector.broadcast %cst_37 : f32 to vector<8x32xf32>
    %66 = arith.addf %65, %64 : vector<8x32xf32>
    %67 = vector.extract_strided_slice %55 {offsets = [0, 32], sizes = [8, 32], strides = [1, 1]} : vector<8x96xf32> to vector<8x32xf32>
    %68 = vector.extract_strided_slice %19 {offsets = [0, 32], sizes = [8, 32], strides = [1, 1]} : vector<8x96xf32> to vector<8x32xf32>
    %69 = arith.addf %67, %68 : vector<8x32xf32>
    %cst_38 = arith.constant 5.000000e-01 : f32
    %70 = vector.broadcast %cst_38 : f32 to vector<8x32xf32>
    %71 = arith.mulf %70, %69 : vector<8x32xf32>
    %72 = math.tanh %71 : vector<8x32xf32>
    %cst_39 = arith.constant 5.000000e-01 : f32
    %73 = vector.broadcast %cst_39 : f32 to vector<8x32xf32>
    %74 = arith.mulf %73, %72 : vector<8x32xf32>
    %cst_40 = arith.constant 5.000000e-01 : f32
    %75 = vector.broadcast %cst_40 : f32 to vector<8x32xf32>
    %76 = arith.subf %75, %74 : vector<8x32xf32>
    %77 = arith.mulf %56, %76 : vector<8x32xf32>
    %78 = arith.mulf %56, %17 : vector<8x32xf32>
    %79 = vector.extract_strided_slice %55 {offsets = [0, 64], sizes = [8, 32], strides = [1, 1]} : vector<8x96xf32> to vector<8x32xf32>
    %80 = vector.extract_strided_slice %19 {offsets = [0, 64], sizes = [8, 32], strides = [1, 1]} : vector<8x96xf32> to vector<8x32xf32>
    %81 = vector.broadcast %15 : vector<1x32xf32> to vector<8x32xf32>
    %82 = arith.addf %80, %81 : vector<8x32xf32>
    %83 = arith.mulf %66, %82 : vector<8x32xf32>
    %84 = arith.addf %79, %83 : vector<8x32xf32>
    %85 = math.tanh %84 : vector<8x32xf32>
    %86 = arith.subf %85, %17 : vector<8x32xf32>
    %87 = arith.mulf %77, %86 : vector<8x32xf32>
    %88 = arith.addf %17, %87 : vector<8x32xf32>
    %89 = arith.addf %78, %87 : vector<8x32xf32>
    %c0_41 = arith.constant 0 : index
    %c0_42 = arith.constant 0 : index
    %90 = vector.load %arg13[%c0_41, %c0_42] : memref<64x64xf32, #tpu.memory_space<vmem>>, vector<8x32xf32>
    tpu.vector_store %arg13[%c0_41, %c0_42], %54 {strides = array<i32>} : memref<64x64xf32, #tpu.memory_space<vmem>>, vector<8x32xf32>,
    %c56_43 = arith.constant 56 : index
    %c32 = arith.constant 32 : index
    %91 = vector.load %arg13[%c56_43, %c32] : memref<64x64xf32, #tpu.memory_space<vmem>>, vector<8x32xf32>
    tpu.vector_store %arg13[%c56_43, %c32], %89 {strides = array<i32>} : memref<64x64xf32, #tpu.memory_space<vmem>>, vector<8x32xf32>,
    %cst_44 = arith.constant dense<0.000000e+00> : vector<8x96xf32>
    %92 = tpu.matmul %53, %12, %cst_44 {dimension_numbers = #tpu.dot_dimension_numbers<[1], [0], [0], [1], [0, 0, 1, 1], [], []>} : vector<8x32xf32>, vector<32x96xf32>, vector<8x96xf32> -> vector<8x96xf32>
    %cst_45 = arith.constant dense<0.000000e+00> : vector<8x96xf32>
    %93 = tpu.matmul %88, %13, %cst_45 {dimension_numbers = #tpu.dot_dimension_numbers<[1], [0], [0], [1], [0, 0, 1, 1], [], []>} : vector<8x32xf32>, vector<32x96xf32>, vector<8x96xf32> -> vector<8x96xf32>
    %c8 = arith.constant 8 : index
    %c0_46 = arith.constant 0 : index
    %94 = vector.load %arg11[%c8, %c0_46] : memref<64x96xf32, #tpu.memory_space<vmem>>, vector<8x96xf32>
    %c8_47 = arith.constant 8 : index
    %c0_48 = arith.constant 0 : index
    %95 = vector.load %arg1[%c8_47, %c0_48] : memref<64x32xf32, #tpu.memory_space<vmem>>, vector<8x32xf32>
    %96 = vector.extract_strided_slice %94 {offsets = [0, 0], sizes = [8, 32], strides = [1, 1]} : vector<8x96xf32> to vector<8x32xf32>
    %97 = vector.extract_strided_slice %92 {offsets = [0, 0], sizes = [8, 32], strides = [1, 1]} : vector<8x96xf32> to vector<8x32xf32>
    %98 = arith.addf %96, %97 : vector<8x32xf32>
    %cst_49 = arith.constant 5.000000e-01 : f32
    %99 = vector.broadcast %cst_49 : f32 to vector<8x32xf32>
    %100 = arith.mulf %99, %98 : vector<8x32xf32>
    %101 = math.tanh %100 : vector<8x32xf32>
    %cst_50 = arith.constant 5.000000e-01 : f32
    %102 = vector.broadcast %cst_50 : f32 to vector<8x32xf32>
    %103 = arith.mulf %102, %101 : vector<8x32xf32>
    %cst_51 = arith.constant 5.000000e-01 : f32
    %104 = vector.broadcast %cst_51 : f32 to vector<8x32xf32>
    %105 = arith.addf %104, %103 : vector<8x32xf32>
    %106 = vector.extract_strided_slice %94 {offsets = [0, 32], sizes = [8, 32], strides = [1, 1]} : vector<8x96xf32> to vector<8x32xf32>
    %107 = vector.extract_strided_slice %92 {offsets = [0, 32], sizes = [8, 32], strides = [1, 1]} : vector<8x96xf32> to vector<8x32xf32>
    %108 = arith.addf %106, %107 : vector<8x32xf32>
    %cst_52 = arith.constant 5.000000e-01 : f32
    %109 = vector.broadcast %cst_52 : f32 to vector<8x32xf32>
    %110 = arith.mulf %109, %108 : vector<8x32xf32>
    %111 = math.tanh %110 : vector<8x32xf32>
    %cst_53 = arith.constant 5.000000e-01 : f32
    %112 = vector.broadcast %cst_53 : f32 to vector<8x32xf32>
    %113 = arith.mulf %112, %111 : vector<8x32xf32>
    %cst_54 = arith.constant 5.000000e-01 : f32
    %114 = vector.broadcast %cst_54 : f32 to vector<8x32xf32>
    %115 = arith.subf %114, %113 : vector<8x32xf32>
    %116 = arith.mulf %95, %115 : vector<8x32xf32>
    %117 = arith.mulf %95, %53 : vector<8x32xf32>
    %118 = vector.extract_strided_slice %94 {offsets = [0, 64], sizes = [8, 32], strides = [1, 1]} : vector<8x96xf32> to vector<8x32xf32>
    %119 = vector.extract_strided_slice %92 {offsets = [0, 64], sizes = [8, 32], strides = [1, 1]} : vector<8x96xf32> to vector<8x32xf32>
    %120 = vector.broadcast %14 : vector<1x32xf32> to vector<8x32xf32>
    %121 = arith.addf %119, %120 : vector<8x32xf32>
    %122 = arith.mulf %105, %121 : vector<8x32xf32>
    %123 = arith.addf %118, %122 : vector<8x32xf32>
    %124 = math.tanh %123 : vector<8x32xf32>
    %125 = arith.subf %124, %53 : vector<8x32xf32>
    %126 = arith.mulf %116, %125 : vector<8x32xf32>
    %127 = arith.addf %53, %126 : vector<8x32xf32>
    %128 = arith.addf %117, %126 : vector<8x32xf32>
    %c48 = arith.constant 48 : index
    %c0_55 = arith.constant 0 : index
    %129 = vector.load %arg12[%c48, %c0_55] : memref<64x96xf32, #tpu.memory_space<vmem>>, vector<8x96xf32>
    %c48_56 = arith.constant 48 : index
    %c0_57 = arith.constant 0 : index
    %130 = vector.load %arg1[%c48_56, %c0_57] : memref<64x32xf32, #tpu.memory_space<vmem>>, vector<8x32xf32>
    %131 = vector.extract_strided_slice %129 {offsets = [0, 0], sizes = [8, 32], strides = [1, 1]} : vector<8x96xf32> to vector<8x32xf32>
    %132 = vector.extract_strided_slice %93 {offsets = [0, 0], sizes = [8, 32], strides = [1, 1]} : vector<8x96xf32> to vector<8x32xf32>
    %133 = arith.addf %131, %132 : vector<8x32xf32>
    %cst_58 = arith.constant 5.000000e-01 : f32
    %134 = vector.broadcast %cst_58 : f32 to vector<8x32xf32>
    %135 = arith.mulf %134, %133 : vector<8x32xf32>
    %136 = math.tanh %135 : vector<8x32xf32>
    %cst_59 = arith.constant 5.000000e-01 : f32
    %137 = vector.broadcast %cst_59 : f32 to vector<8x32xf32>
    %138 = arith.mulf %137, %136 : vector<8x32xf32>
    %cst_60 = arith.constant 5.000000e-01 : f32
    %139 = vector.broadcast %cst_60 : f32 to vector<8x32xf32>
    %140 = arith.addf %139, %138 : vector<8x32xf32>
    %141 = vector.extract_strided_slice %129 {offsets = [0, 32], sizes = [8, 32], strides = [1, 1]} : vector<8x96xf32> to vector<8x32xf32>
    %142 = vector.extract_strided_slice %93 {offsets = [0, 32], sizes = [8, 32], strides = [1, 1]} : vector<8x96xf32> to vector<8x32xf32>
    %143 = arith.addf %141, %142 : vector<8x32xf32>
    %cst_61 = arith.constant 5.000000e-01 : f32
    %144 = vector.broadcast %cst_61 : f32 to vector<8x32xf32>
    %145 = arith.mulf %144, %143 : vector<8x32xf32>
    %146 = math.tanh %145 : vector<8x32xf32>
    %cst_62 = arith.constant 5.000000e-01 : f32
    %147 = vector.broadcast %cst_62 : f32 to vector<8x32xf32>
    %148 = arith.mulf %147, %146 : vector<8x32xf32>
    %cst_63 = arith.constant 5.000000e-01 : f32
    %149 = vector.broadcast %cst_63 : f32 to vector<8x32xf32>
    %150 = arith.subf %149, %148 : vector<8x32xf32>
    %151 = arith.mulf %130, %150 : vector<8x32xf32>
    %152 = arith.mulf %130, %88 : vector<8x32xf32>
    %153 = vector.extract_strided_slice %129 {offsets = [0, 64], sizes = [8, 32], strides = [1, 1]} : vector<8x96xf32> to vector<8x32xf32>
    %154 = vector.extract_strided_slice %93 {offsets = [0, 64], sizes = [8, 32], strides = [1, 1]} : vector<8x96xf32> to vector<8x32xf32>
    %155 = vector.broadcast %15 : vector<1x32xf32> to vector<8x32xf32>
    %156 = arith.addf %154, %155 : vector<8x32xf32>
    %157 = arith.mulf %140, %156 : vector<8x32xf32>
    %158 = arith.addf %153, %157 : vector<8x32xf32>
    %159 = math.tanh %158 : vector<8x32xf32>
    %160 = arith.subf %159, %88 : vector<8x32xf32>
    %161 = arith.mulf %151, %160 : vector<8x32xf32>
    %162 = arith.addf %88, %161 : vector<8x32xf32>
    %163 = arith.addf %152, %161 : vector<8x32xf32>
    %c8_64 = arith.constant 8 : index
    %c0_65 = arith.constant 0 : index
    %164 = vector.load %arg13[%c8_64, %c0_65] : memref<64x64xf32, #tpu.memory_space<vmem>>, vector<8x32xf32>
    tpu.vector_store %arg13[%c8_64, %c0_65], %128 {strides = array<i32>} : memref<64x64xf32, #tpu.memory_space<vmem>>, vector<8x32xf32>,
    %c48_66 = arith.constant 48 : index
    %c32_67 = arith.constant 32 : index
    %165 = vector.load %arg13[%c48_66, %c32_67] : memref<64x64xf32, #tpu.memory_space<vmem>>, vector<8x32xf32>
    tpu.vector_store %arg13[%c48_66, %c32_67], %163 {strides = array<i32>} : memref<64x64xf32, #tpu.memory_space<vmem>>, vector<8x32xf32>,
    %cst_68 = arith.constant dense<0.000000e+00> : vector<8x96xf32>
    %166 = tpu.matmul %127, %12, %cst_68 {dimension_numbers = #tpu.dot_dimension_numbers<[1], [0], [0], [1], [0, 0, 1, 1], [], []>} : vector<8x32xf32>, vector<32x96xf32>, vector<8x96xf32> -> vector<8x96xf32>
    %cst_69 = arith.constant dense<0.000000e+00> : vector<8x96xf32>
    %167 = tpu.matmul %162, %13, %cst_69 {dimension_numbers = #tpu.dot_dimension_numbers<[1], [0], [0], [1], [0, 0, 1, 1], [], []>} : vector<8x32xf32>, vector<32x96xf32>, vector<8x96xf32> -> vector<8x96xf32>
    %c16 = arith.constant 16 : index
    %c0_70 = arith.constant 0 : index
    %168 = vector.load %arg11[%c16, %c0_70] : memref<64x96xf32, #tpu.memory_space<vmem>>, vector<8x96xf32>
    %c16_71 = arith.constant 16 : index
    %c0_72 = arith.constant 0 : index
    %169 = vector.load %arg1[%c16_71, %c0_72] : memref<64x32xf32, #tpu.memory_space<vmem>>, vector<8x32xf32>
    %170 = vector.extract_strided_slice %168 {offsets = [0, 0], sizes = [8, 32], strides = [1, 1]} : vector<8x96xf32> to vector<8x32xf32>
    %171 = vector.extract_strided_slice %166 {offsets = [0, 0], sizes = [8, 32], strides = [1, 1]} : vector<8x96xf32> to vector<8x32xf32>
    %172 = arith.addf %170, %171 : vector<8x32xf32>
    %cst_73 = arith.constant 5.000000e-01 : f32
    %173 = vector.broadcast %cst_73 : f32 to vector<8x32xf32>
    %174 = arith.mulf %173, %172 : vector<8x32xf32>
    %175 = math.tanh %174 : vector<8x32xf32>
    %cst_74 = arith.constant 5.000000e-01 : f32
    %176 = vector.broadcast %cst_74 : f32 to vector<8x32xf32>
    %177 = arith.mulf %176, %175 : vector<8x32xf32>
    %cst_75 = arith.constant 5.000000e-01 : f32
    %178 = vector.broadcast %cst_75 : f32 to vector<8x32xf32>
    %179 = arith.addf %178, %177 : vector<8x32xf32>
    %180 = vector.extract_strided_slice %168 {offsets = [0, 32], sizes = [8, 32], strides = [1, 1]} : vector<8x96xf32> to vector<8x32xf32>
    %181 = vector.extract_strided_slice %166 {offsets = [0, 32], sizes = [8, 32], strides = [1, 1]} : vector<8x96xf32> to vector<8x32xf32>
    %182 = arith.addf %180, %181 : vector<8x32xf32>
    %cst_76 = arith.constant 5.000000e-01 : f32
    %183 = vector.broadcast %cst_76 : f32 to vector<8x32xf32>
    %184 = arith.mulf %183, %182 : vector<8x32xf32>
    %185 = math.tanh %184 : vector<8x32xf32>
    %cst_77 = arith.constant 5.000000e-01 : f32
    %186 = vector.broadcast %cst_77 : f32 to vector<8x32xf32>
    %187 = arith.mulf %186, %185 : vector<8x32xf32>
    %cst_78 = arith.constant 5.000000e-01 : f32
    %188 = vector.broadcast %cst_78 : f32 to vector<8x32xf32>
    %189 = arith.subf %188, %187 : vector<8x32xf32>
    %190 = arith.mulf %169, %189 : vector<8x32xf32>
    %191 = arith.mulf %169, %127 : vector<8x32xf32>
    %192 = vector.extract_strided_slice %168 {offsets = [0, 64], sizes = [8, 32], strides = [1, 1]} : vector<8x96xf32> to vector<8x32xf32>
    %193 = vector.extract_strided_slice %166 {offsets = [0, 64], sizes = [8, 32], strides = [1, 1]} : vector<8x96xf32> to vector<8x32xf32>
    %194 = vector.broadcast %14 : vector<1x32xf32> to vector<8x32xf32>
    %195 = arith.addf %193, %194 : vector<8x32xf32>
    %196 = arith.mulf %179, %195 : vector<8x32xf32>
    %197 = arith.addf %192, %196 : vector<8x32xf32>
    %198 = math.tanh %197 : vector<8x32xf32>
    %199 = arith.subf %198, %127 : vector<8x32xf32>
    %200 = arith.mulf %190, %199 : vector<8x32xf32>
    %201 = arith.addf %127, %200 : vector<8x32xf32>
    %202 = arith.addf %191, %200 : vector<8x32xf32>
    %c40 = arith.constant 40 : index
    %c0_79 = arith.constant 0 : index
    %203 = vector.load %arg12[%c40, %c0_79] : memref<64x96xf32, #tpu.memory_space<vmem>>, vector<8x96xf32>
    %c40_80 = arith.constant 40 : index
    %c0_81 = arith.constant 0 : index
    %204 = vector.load %arg1[%c40_80, %c0_81] : memref<64x32xf32, #tpu.memory_space<vmem>>, vector<8x32xf32>
    %205 = vector.extract_strided_slice %203 {offsets = [0, 0], sizes = [8, 32], strides = [1, 1]} : vector<8x96xf32> to vector<8x32xf32>
    %206 = vector.extract_strided_slice %167 {offsets = [0, 0], sizes = [8, 32], strides = [1, 1]} : vector<8x96xf32> to vector<8x32xf32>
    %207 = arith.addf %205, %206 : vector<8x32xf32>
    %cst_82 = arith.constant 5.000000e-01 : f32
    %208 = vector.broadcast %cst_82 : f32 to vector<8x32xf32>
    %209 = arith.mulf %208, %207 : vector<8x32xf32>
    %210 = math.tanh %209 : vector<8x32xf32>
    %cst_83 = arith.constant 5.000000e-01 : f32
    %211 = vector.broadcast %cst_83 : f32 to vector<8x32xf32>
    %212 = arith.mulf %211, %210 : vector<8x32xf32>
    %cst_84 = arith.constant 5.000000e-01 : f32
    %213 = vector.broadcast %cst_84 : f32 to vector<8x32xf32>
    %214 = arith.addf %213, %212 : vector<8x32xf32>
    %215 = vector.extract_strided_slice %203 {offsets = [0, 32], sizes = [8, 32], strides = [1, 1]} : vector<8x96xf32> to vector<8x32xf32>
    %216 = vector.extract_strided_slice %167 {offsets = [0, 32], sizes = [8, 32], strides = [1, 1]} : vector<8x96xf32> to vector<8x32xf32>
    %217 = arith.addf %215, %216 : vector<8x32xf32>
    %cst_85 = arith.constant 5.000000e-01 : f32
    %218 = vector.broadcast %cst_85 : f32 to vector<8x32xf32>
    %219 = arith.mulf %218, %217 : vector<8x32xf32>
    %220 = math.tanh %219 : vector<8x32xf32>
    %cst_86 = arith.constant 5.000000e-01 : f32
    %221 = vector.broadcast %cst_86 : f32 to vector<8x32xf32>
    %222 = arith.mulf %221, %220 : vector<8x32xf32>
    %cst_87 = arith.constant 5.000000e-01 : f32
    %223 = vector.broadcast %cst_87 : f32 to vector<8x32xf32>
    %224 = arith.subf %223, %222 : vector<8x32xf32>
    %225 = arith.mulf %204, %224 : vector<8x32xf32>
    %226 = arith.mulf %204, %162 : vector<8x32xf32>
    %227 = vector.extract_strided_slice %203 {offsets = [0, 64], sizes = [8, 32], strides = [1, 1]} : vector<8x96xf32> to vector<8x32xf32>
    %228 = vector.extract_strided_slice %167 {offsets = [0, 64], sizes = [8, 32], strides = [1, 1]} : vector<8x96xf32> to vector<8x32xf32>
    %229 = vector.broadcast %15 : vector<1x32xf32> to vector<8x32xf32>
    %230 = arith.addf %228, %229 : vector<8x32xf32>
    %231 = arith.mulf %214, %230 : vector<8x32xf32>
    %232 = arith.addf %227, %231 : vector<8x32xf32>
    %233 = math.tanh %232 : vector<8x32xf32>
    %234 = arith.subf %233, %162 : vector<8x32xf32>
    %235 = arith.mulf %225, %234 : vector<8x32xf32>
    %236 = arith.addf %162, %235 : vector<8x32xf32>
    %237 = arith.addf %226, %235 : vector<8x32xf32>
    %c16_88 = arith.constant 16 : index
    %c0_89 = arith.constant 0 : index
    %238 = vector.load %arg13[%c16_88, %c0_89] : memref<64x64xf32, #tpu.memory_space<vmem>>, vector<8x32xf32>
    tpu.vector_store %arg13[%c16_88, %c0_89], %202 {strides = array<i32>} : memref<64x64xf32, #tpu.memory_space<vmem>>, vector<8x32xf32>,
    %c40_90 = arith.constant 40 : index
    %c32_91 = arith.constant 32 : index
    %239 = vector.load %arg13[%c40_90, %c32_91] : memref<64x64xf32, #tpu.memory_space<vmem>>, vector<8x32xf32>
    tpu.vector_store %arg13[%c40_90, %c32_91], %237 {strides = array<i32>} : memref<64x64xf32, #tpu.memory_space<vmem>>, vector<8x32xf32>,
    %cst_92 = arith.constant dense<0.000000e+00> : vector<8x96xf32>
    %240 = tpu.matmul %201, %12, %cst_92 {dimension_numbers = #tpu.dot_dimension_numbers<[1], [0], [0], [1], [0, 0, 1, 1], [], []>} : vector<8x32xf32>, vector<32x96xf32>, vector<8x96xf32> -> vector<8x96xf32>
    %cst_93 = arith.constant dense<0.000000e+00> : vector<8x96xf32>
    %241 = tpu.matmul %236, %13, %cst_93 {dimension_numbers = #tpu.dot_dimension_numbers<[1], [0], [0], [1], [0, 0, 1, 1], [], []>} : vector<8x32xf32>, vector<32x96xf32>, vector<8x96xf32> -> vector<8x96xf32>
    %c24 = arith.constant 24 : index
    %c0_94 = arith.constant 0 : index
    %242 = vector.load %arg11[%c24, %c0_94] : memref<64x96xf32, #tpu.memory_space<vmem>>, vector<8x96xf32>
    %c24_95 = arith.constant 24 : index
    %c0_96 = arith.constant 0 : index
    %243 = vector.load %arg1[%c24_95, %c0_96] : memref<64x32xf32, #tpu.memory_space<vmem>>, vector<8x32xf32>
    %244 = vector.extract_strided_slice %242 {offsets = [0, 0], sizes = [8, 32], strides = [1, 1]} : vector<8x96xf32> to vector<8x32xf32>
    %245 = vector.extract_strided_slice %240 {offsets = [0, 0], sizes = [8, 32], strides = [1, 1]} : vector<8x96xf32> to vector<8x32xf32>
    %246 = arith.addf %244, %245 : vector<8x32xf32>
    %cst_97 = arith.constant 5.000000e-01 : f32
    %247 = vector.broadcast %cst_97 : f32 to vector<8x32xf32>
    %248 = arith.mulf %247, %246 : vector<8x32xf32>
    %249 = math.tanh %248 : vector<8x32xf32>
    %cst_98 = arith.constant 5.000000e-01 : f32
    %250 = vector.broadcast %cst_98 : f32 to vector<8x32xf32>
    %251 = arith.mulf %250, %249 : vector<8x32xf32>
    %cst_99 = arith.constant 5.000000e-01 : f32
    %252 = vector.broadcast %cst_99 : f32 to vector<8x32xf32>
    %253 = arith.addf %252, %251 : vector<8x32xf32>
    %254 = vector.extract_strided_slice %242 {offsets = [0, 32], sizes = [8, 32], strides = [1, 1]} : vector<8x96xf32> to vector<8x32xf32>
    %255 = vector.extract_strided_slice %240 {offsets = [0, 32], sizes = [8, 32], strides = [1, 1]} : vector<8x96xf32> to vector<8x32xf32>
    %256 = arith.addf %254, %255 : vector<8x32xf32>
    %cst_100 = arith.constant 5.000000e-01 : f32
    %257 = vector.broadcast %cst_100 : f32 to vector<8x32xf32>
    %258 = arith.mulf %257, %256 : vector<8x32xf32>
    %259 = math.tanh %258 : vector<8x32xf32>
    %cst_101 = arith.constant 5.000000e-01 : f32
    %260 = vector.broadcast %cst_101 : f32 to vector<8x32xf32>
    %261 = arith.mulf %260, %259 : vector<8x32xf32>
    %cst_102 = arith.constant 5.000000e-01 : f32
    %262 = vector.broadcast %cst_102 : f32 to vector<8x32xf32>
    %263 = arith.subf %262, %261 : vector<8x32xf32>
    %264 = arith.mulf %243, %263 : vector<8x32xf32>
    %265 = arith.mulf %243, %201 : vector<8x32xf32>
    %266 = vector.extract_strided_slice %242 {offsets = [0, 64], sizes = [8, 32], strides = [1, 1]} : vector<8x96xf32> to vector<8x32xf32>
    %267 = vector.extract_strided_slice %240 {offsets = [0, 64], sizes = [8, 32], strides = [1, 1]} : vector<8x96xf32> to vector<8x32xf32>
    %268 = vector.broadcast %14 : vector<1x32xf32> to vector<8x32xf32>
    %269 = arith.addf %267, %268 : vector<8x32xf32>
    %270 = arith.mulf %253, %269 : vector<8x32xf32>
    %271 = arith.addf %266, %270 : vector<8x32xf32>
    %272 = math.tanh %271 : vector<8x32xf32>
    %273 = arith.subf %272, %201 : vector<8x32xf32>
    %274 = arith.mulf %264, %273 : vector<8x32xf32>
    %275 = arith.addf %201, %274 : vector<8x32xf32>
    %276 = arith.addf %265, %274 : vector<8x32xf32>
    %c32_103 = arith.constant 32 : index
    %c0_104 = arith.constant 0 : index
    %277 = vector.load %arg12[%c32_103, %c0_104] : memref<64x96xf32, #tpu.memory_space<vmem>>, vector<8x96xf32>
    %c32_105 = arith.constant 32 : index
    %c0_106 = arith.constant 0 : index
    %278 = vector.load %arg1[%c32_105, %c0_106] : memref<64x32xf32, #tpu.memory_space<vmem>>, vector<8x32xf32>
    %279 = vector.extract_strided_slice %277 {offsets = [0, 0], sizes = [8, 32], strides = [1, 1]} : vector<8x96xf32> to vector<8x32xf32>
    %280 = vector.extract_strided_slice %241 {offsets = [0, 0], sizes = [8, 32], strides = [1, 1]} : vector<8x96xf32> to vector<8x32xf32>
    %281 = arith.addf %279, %280 : vector<8x32xf32>
    %cst_107 = arith.constant 5.000000e-01 : f32
    %282 = vector.broadcast %cst_107 : f32 to vector<8x32xf32>
    %283 = arith.mulf %282, %281 : vector<8x32xf32>
    %284 = math.tanh %283 : vector<8x32xf32>
    %cst_108 = arith.constant 5.000000e-01 : f32
    %285 = vector.broadcast %cst_108 : f32 to vector<8x32xf32>
    %286 = arith.mulf %285, %284 : vector<8x32xf32>
    %cst_109 = arith.constant 5.000000e-01 : f32
    %287 = vector.broadcast %cst_109 : f32 to vector<8x32xf32>
    %288 = arith.addf %287, %286 : vector<8x32xf32>
    %289 = vector.extract_strided_slice %277 {offsets = [0, 32], sizes = [8, 32], strides = [1, 1]} : vector<8x96xf32> to vector<8x32xf32>
    %290 = vector.extract_strided_slice %241 {offsets = [0, 32], sizes = [8, 32], strides = [1, 1]} : vector<8x96xf32> to vector<8x32xf32>
    %291 = arith.addf %289, %290 : vector<8x32xf32>
    %cst_110 = arith.constant 5.000000e-01 : f32
    %292 = vector.broadcast %cst_110 : f32 to vector<8x32xf32>
    %293 = arith.mulf %292, %291 : vector<8x32xf32>
    %294 = math.tanh %293 : vector<8x32xf32>
    %cst_111 = arith.constant 5.000000e-01 : f32
    %295 = vector.broadcast %cst_111 : f32 to vector<8x32xf32>
    %296 = arith.mulf %295, %294 : vector<8x32xf32>
    %cst_112 = arith.constant 5.000000e-01 : f32
    %297 = vector.broadcast %cst_112 : f32 to vector<8x32xf32>
    %298 = arith.subf %297, %296 : vector<8x32xf32>
    %299 = arith.mulf %278, %298 : vector<8x32xf32>
    %300 = arith.mulf %278, %236 : vector<8x32xf32>
    %301 = vector.extract_strided_slice %277 {offsets = [0, 64], sizes = [8, 32], strides = [1, 1]} : vector<8x96xf32> to vector<8x32xf32>
    %302 = vector.extract_strided_slice %241 {offsets = [0, 64], sizes = [8, 32], strides = [1, 1]} : vector<8x96xf32> to vector<8x32xf32>
    %303 = vector.broadcast %15 : vector<1x32xf32> to vector<8x32xf32>
    %304 = arith.addf %302, %303 : vector<8x32xf32>
    %305 = arith.mulf %288, %304 : vector<8x32xf32>
    %306 = arith.addf %301, %305 : vector<8x32xf32>
    %307 = math.tanh %306 : vector<8x32xf32>
    %308 = arith.subf %307, %236 : vector<8x32xf32>
    %309 = arith.mulf %299, %308 : vector<8x32xf32>
    %310 = arith.addf %236, %309 : vector<8x32xf32>
    %311 = arith.addf %300, %309 : vector<8x32xf32>
    %c24_113 = arith.constant 24 : index
    %c0_114 = arith.constant 0 : index
    %312 = vector.load %arg13[%c24_113, %c0_114] : memref<64x64xf32, #tpu.memory_space<vmem>>, vector<8x32xf32>
    tpu.vector_store %arg13[%c24_113, %c0_114], %276 {strides = array<i32>} : memref<64x64xf32, #tpu.memory_space<vmem>>, vector<8x32xf32>,
    %c32_115 = arith.constant 32 : index
    %c32_116 = arith.constant 32 : index
    %313 = vector.load %arg13[%c32_115, %c32_116] : memref<64x64xf32, #tpu.memory_space<vmem>>, vector<8x32xf32>
    tpu.vector_store %arg13[%c32_115, %c32_116], %311 {strides = array<i32>} : memref<64x64xf32, #tpu.memory_space<vmem>>, vector<8x32xf32>,
    %cst_117 = arith.constant dense<0.000000e+00> : vector<8x96xf32>
    %314 = tpu.matmul %275, %12, %cst_117 {dimension_numbers = #tpu.dot_dimension_numbers<[1], [0], [0], [1], [0, 0, 1, 1], [], []>} : vector<8x32xf32>, vector<32x96xf32>, vector<8x96xf32> -> vector<8x96xf32>
    %cst_118 = arith.constant dense<0.000000e+00> : vector<8x96xf32>
    %315 = tpu.matmul %310, %13, %cst_118 {dimension_numbers = #tpu.dot_dimension_numbers<[1], [0], [0], [1], [0, 0, 1, 1], [], []>} : vector<8x32xf32>, vector<32x96xf32>, vector<8x96xf32> -> vector<8x96xf32>
    %c32_119 = arith.constant 32 : index
    %c0_120 = arith.constant 0 : index
    %316 = vector.load %arg11[%c32_119, %c0_120] : memref<64x96xf32, #tpu.memory_space<vmem>>, vector<8x96xf32>
    %c32_121 = arith.constant 32 : index
    %c0_122 = arith.constant 0 : index
    %317 = vector.load %arg1[%c32_121, %c0_122] : memref<64x32xf32, #tpu.memory_space<vmem>>, vector<8x32xf32>
    %318 = vector.extract_strided_slice %316 {offsets = [0, 0], sizes = [8, 32], strides = [1, 1]} : vector<8x96xf32> to vector<8x32xf32>
    %319 = vector.extract_strided_slice %314 {offsets = [0, 0], sizes = [8, 32], strides = [1, 1]} : vector<8x96xf32> to vector<8x32xf32>
    %320 = arith.addf %318, %319 : vector<8x32xf32>
    %cst_123 = arith.constant 5.000000e-01 : f32
    %321 = vector.broadcast %cst_123 : f32 to vector<8x32xf32>
    %322 = arith.mulf %321, %320 : vector<8x32xf32>
    %323 = math.tanh %322 : vector<8x32xf32>
    %cst_124 = arith.constant 5.000000e-01 : f32
    %324 = vector.broadcast %cst_124 : f32 to vector<8x32xf32>
    %325 = arith.mulf %324, %323 : vector<8x32xf32>
    %cst_125 = arith.constant 5.000000e-01 : f32
    %326 = vector.broadcast %cst_125 : f32 to vector<8x32xf32>
    %327 = arith.addf %326, %325 : vector<8x32xf32>
    %328 = vector.extract_strided_slice %316 {offsets = [0, 32], sizes = [8, 32], strides = [1, 1]} : vector<8x96xf32> to vector<8x32xf32>
    %329 = vector.extract_strided_slice %314 {offsets = [0, 32], sizes = [8, 32], strides = [1, 1]} : vector<8x96xf32> to vector<8x32xf32>
    %330 = arith.addf %328, %329 : vector<8x32xf32>
    %cst_126 = arith.constant 5.000000e-01 : f32
    %331 = vector.broadcast %cst_126 : f32 to vector<8x32xf32>
    %332 = arith.mulf %331, %330 : vector<8x32xf32>
    %333 = math.tanh %332 : vector<8x32xf32>
    %cst_127 = arith.constant 5.000000e-01 : f32
    %334 = vector.broadcast %cst_127 : f32 to vector<8x32xf32>
    %335 = arith.mulf %334, %333 : vector<8x32xf32>
    %cst_128 = arith.constant 5.000000e-01 : f32
    %336 = vector.broadcast %cst_128 : f32 to vector<8x32xf32>
    %337 = arith.subf %336, %335 : vector<8x32xf32>
    %338 = arith.mulf %317, %337 : vector<8x32xf32>
    %339 = arith.mulf %317, %275 : vector<8x32xf32>
    %340 = vector.extract_strided_slice %316 {offsets = [0, 64], sizes = [8, 32], strides = [1, 1]} : vector<8x96xf32> to vector<8x32xf32>
    %341 = vector.extract_strided_slice %314 {offsets = [0, 64], sizes = [8, 32], strides = [1, 1]} : vector<8x96xf32> to vector<8x32xf32>
    %342 = vector.broadcast %14 : vector<1x32xf32> to vector<8x32xf32>
    %343 = arith.addf %341, %342 : vector<8x32xf32>
    %344 = arith.mulf %327, %343 : vector<8x32xf32>
    %345 = arith.addf %340, %344 : vector<8x32xf32>
    %346 = math.tanh %345 : vector<8x32xf32>
    %347 = arith.subf %346, %275 : vector<8x32xf32>
    %348 = arith.mulf %338, %347 : vector<8x32xf32>
    %349 = arith.addf %275, %348 : vector<8x32xf32>
    %350 = arith.addf %339, %348 : vector<8x32xf32>
    %c24_129 = arith.constant 24 : index
    %c0_130 = arith.constant 0 : index
    %351 = vector.load %arg12[%c24_129, %c0_130] : memref<64x96xf32, #tpu.memory_space<vmem>>, vector<8x96xf32>
    %c24_131 = arith.constant 24 : index
    %c0_132 = arith.constant 0 : index
    %352 = vector.load %arg1[%c24_131, %c0_132] : memref<64x32xf32, #tpu.memory_space<vmem>>, vector<8x32xf32>
    %353 = vector.extract_strided_slice %351 {offsets = [0, 0], sizes = [8, 32], strides = [1, 1]} : vector<8x96xf32> to vector<8x32xf32>
    %354 = vector.extract_strided_slice %315 {offsets = [0, 0], sizes = [8, 32], strides = [1, 1]} : vector<8x96xf32> to vector<8x32xf32>
    %355 = arith.addf %353, %354 : vector<8x32xf32>
    %cst_133 = arith.constant 5.000000e-01 : f32
    %356 = vector.broadcast %cst_133 : f32 to vector<8x32xf32>
    %357 = arith.mulf %356, %355 : vector<8x32xf32>
    %358 = math.tanh %357 : vector<8x32xf32>
    %cst_134 = arith.constant 5.000000e-01 : f32
    %359 = vector.broadcast %cst_134 : f32 to vector<8x32xf32>
    %360 = arith.mulf %359, %358 : vector<8x32xf32>
    %cst_135 = arith.constant 5.000000e-01 : f32
    %361 = vector.broadcast %cst_135 : f32 to vector<8x32xf32>
    %362 = arith.addf %361, %360 : vector<8x32xf32>
    %363 = vector.extract_strided_slice %351 {offsets = [0, 32], sizes = [8, 32], strides = [1, 1]} : vector<8x96xf32> to vector<8x32xf32>
    %364 = vector.extract_strided_slice %315 {offsets = [0, 32], sizes = [8, 32], strides = [1, 1]} : vector<8x96xf32> to vector<8x32xf32>
    %365 = arith.addf %363, %364 : vector<8x32xf32>
    %cst_136 = arith.constant 5.000000e-01 : f32
    %366 = vector.broadcast %cst_136 : f32 to vector<8x32xf32>
    %367 = arith.mulf %366, %365 : vector<8x32xf32>
    %368 = math.tanh %367 : vector<8x32xf32>
    %cst_137 = arith.constant 5.000000e-01 : f32
    %369 = vector.broadcast %cst_137 : f32 to vector<8x32xf32>
    %370 = arith.mulf %369, %368 : vector<8x32xf32>
    %cst_138 = arith.constant 5.000000e-01 : f32
    %371 = vector.broadcast %cst_138 : f32 to vector<8x32xf32>
    %372 = arith.subf %371, %370 : vector<8x32xf32>
    %373 = arith.mulf %352, %372 : vector<8x32xf32>
    %374 = arith.mulf %352, %310 : vector<8x32xf32>
    %375 = vector.extract_strided_slice %351 {offsets = [0, 64], sizes = [8, 32], strides = [1, 1]} : vector<8x96xf32> to vector<8x32xf32>
    %376 = vector.extract_strided_slice %315 {offsets = [0, 64], sizes = [8, 32], strides = [1, 1]} : vector<8x96xf32> to vector<8x32xf32>
    %377 = vector.broadcast %15 : vector<1x32xf32> to vector<8x32xf32>
    %378 = arith.addf %376, %377 : vector<8x32xf32>
    %379 = arith.mulf %362, %378 : vector<8x32xf32>
    %380 = arith.addf %375, %379 : vector<8x32xf32>
    %381 = math.tanh %380 : vector<8x32xf32>
    %382 = arith.subf %381, %310 : vector<8x32xf32>
    %383 = arith.mulf %373, %382 : vector<8x32xf32>
    %384 = arith.addf %310, %383 : vector<8x32xf32>
    %385 = arith.addf %374, %383 : vector<8x32xf32>
    %c32_139 = arith.constant 32 : index
    %c0_140 = arith.constant 0 : index
    %386 = vector.load %arg13[%c32_139, %c0_140] : memref<64x64xf32, #tpu.memory_space<vmem>>, vector<8x32xf32>
    tpu.vector_store %arg13[%c32_139, %c0_140], %350 {strides = array<i32>} : memref<64x64xf32, #tpu.memory_space<vmem>>, vector<8x32xf32>,
    %c24_141 = arith.constant 24 : index
    %c32_142 = arith.constant 32 : index
    %387 = vector.load %arg13[%c24_141, %c32_142] : memref<64x64xf32, #tpu.memory_space<vmem>>, vector<8x32xf32>
    tpu.vector_store %arg13[%c24_141, %c32_142], %385 {strides = array<i32>} : memref<64x64xf32, #tpu.memory_space<vmem>>, vector<8x32xf32>,
    %cst_143 = arith.constant dense<0.000000e+00> : vector<8x96xf32>
    %388 = tpu.matmul %349, %12, %cst_143 {dimension_numbers = #tpu.dot_dimension_numbers<[1], [0], [0], [1], [0, 0, 1, 1], [], []>} : vector<8x32xf32>, vector<32x96xf32>, vector<8x96xf32> -> vector<8x96xf32>
    %cst_144 = arith.constant dense<0.000000e+00> : vector<8x96xf32>
    %389 = tpu.matmul %384, %13, %cst_144 {dimension_numbers = #tpu.dot_dimension_numbers<[1], [0], [0], [1], [0, 0, 1, 1], [], []>} : vector<8x32xf32>, vector<32x96xf32>, vector<8x96xf32> -> vector<8x96xf32>
    %c40_145 = arith.constant 40 : index
    %c0_146 = arith.constant 0 : index
    %390 = vector.load %arg11[%c40_145, %c0_146] : memref<64x96xf32, #tpu.memory_space<vmem>>, vector<8x96xf32>
    %c40_147 = arith.constant 40 : index
    %c0_148 = arith.constant 0 : index
    %391 = vector.load %arg1[%c40_147, %c0_148] : memref<64x32xf32, #tpu.memory_space<vmem>>, vector<8x32xf32>
    %392 = vector.extract_strided_slice %390 {offsets = [0, 0], sizes = [8, 32], strides = [1, 1]} : vector<8x96xf32> to vector<8x32xf32>
    %393 = vector.extract_strided_slice %388 {offsets = [0, 0], sizes = [8, 32], strides = [1, 1]} : vector<8x96xf32> to vector<8x32xf32>
    %394 = arith.addf %392, %393 : vector<8x32xf32>
    %cst_149 = arith.constant 5.000000e-01 : f32
    %395 = vector.broadcast %cst_149 : f32 to vector<8x32xf32>
    %396 = arith.mulf %395, %394 : vector<8x32xf32>
    %397 = math.tanh %396 : vector<8x32xf32>
    %cst_150 = arith.constant 5.000000e-01 : f32
    %398 = vector.broadcast %cst_150 : f32 to vector<8x32xf32>
    %399 = arith.mulf %398, %397 : vector<8x32xf32>
    %cst_151 = arith.constant 5.000000e-01 : f32
    %400 = vector.broadcast %cst_151 : f32 to vector<8x32xf32>
    %401 = arith.addf %400, %399 : vector<8x32xf32>
    %402 = vector.extract_strided_slice %390 {offsets = [0, 32], sizes = [8, 32], strides = [1, 1]} : vector<8x96xf32> to vector<8x32xf32>
    %403 = vector.extract_strided_slice %388 {offsets = [0, 32], sizes = [8, 32], strides = [1, 1]} : vector<8x96xf32> to vector<8x32xf32>
    %404 = arith.addf %402, %403 : vector<8x32xf32>
    %cst_152 = arith.constant 5.000000e-01 : f32
    %405 = vector.broadcast %cst_152 : f32 to vector<8x32xf32>
    %406 = arith.mulf %405, %404 : vector<8x32xf32>
    %407 = math.tanh %406 : vector<8x32xf32>
    %cst_153 = arith.constant 5.000000e-01 : f32
    %408 = vector.broadcast %cst_153 : f32 to vector<8x32xf32>
    %409 = arith.mulf %408, %407 : vector<8x32xf32>
    %cst_154 = arith.constant 5.000000e-01 : f32
    %410 = vector.broadcast %cst_154 : f32 to vector<8x32xf32>
    %411 = arith.subf %410, %409 : vector<8x32xf32>
    %412 = arith.mulf %391, %411 : vector<8x32xf32>
    %413 = arith.mulf %391, %349 : vector<8x32xf32>
    %414 = vector.extract_strided_slice %390 {offsets = [0, 64], sizes = [8, 32], strides = [1, 1]} : vector<8x96xf32> to vector<8x32xf32>
    %415 = vector.extract_strided_slice %388 {offsets = [0, 64], sizes = [8, 32], strides = [1, 1]} : vector<8x96xf32> to vector<8x32xf32>
    %416 = vector.broadcast %14 : vector<1x32xf32> to vector<8x32xf32>
    %417 = arith.addf %415, %416 : vector<8x32xf32>
    %418 = arith.mulf %401, %417 : vector<8x32xf32>
    %419 = arith.addf %414, %418 : vector<8x32xf32>
    %420 = math.tanh %419 : vector<8x32xf32>
    %421 = arith.subf %420, %349 : vector<8x32xf32>
    %422 = arith.mulf %412, %421 : vector<8x32xf32>
    %423 = arith.addf %349, %422 : vector<8x32xf32>
    %424 = arith.addf %413, %422 : vector<8x32xf32>
    %c16_155 = arith.constant 16 : index
    %c0_156 = arith.constant 0 : index
    %425 = vector.load %arg12[%c16_155, %c0_156] : memref<64x96xf32, #tpu.memory_space<vmem>>, vector<8x96xf32>
    %c16_157 = arith.constant 16 : index
    %c0_158 = arith.constant 0 : index
    %426 = vector.load %arg1[%c16_157, %c0_158] : memref<64x32xf32, #tpu.memory_space<vmem>>, vector<8x32xf32>
    %427 = vector.extract_strided_slice %425 {offsets = [0, 0], sizes = [8, 32], strides = [1, 1]} : vector<8x96xf32> to vector<8x32xf32>
    %428 = vector.extract_strided_slice %389 {offsets = [0, 0], sizes = [8, 32], strides = [1, 1]} : vector<8x96xf32> to vector<8x32xf32>
    %429 = arith.addf %427, %428 : vector<8x32xf32>
    %cst_159 = arith.constant 5.000000e-01 : f32
    %430 = vector.broadcast %cst_159 : f32 to vector<8x32xf32>
    %431 = arith.mulf %430, %429 : vector<8x32xf32>
    %432 = math.tanh %431 : vector<8x32xf32>
    %cst_160 = arith.constant 5.000000e-01 : f32
    %433 = vector.broadcast %cst_160 : f32 to vector<8x32xf32>
    %434 = arith.mulf %433, %432 : vector<8x32xf32>
    %cst_161 = arith.constant 5.000000e-01 : f32
    %435 = vector.broadcast %cst_161 : f32 to vector<8x32xf32>
    %436 = arith.addf %435, %434 : vector<8x32xf32>
    %437 = vector.extract_strided_slice %425 {offsets = [0, 32], sizes = [8, 32], strides = [1, 1]} : vector<8x96xf32> to vector<8x32xf32>
    %438 = vector.extract_strided_slice %389 {offsets = [0, 32], sizes = [8, 32], strides = [1, 1]} : vector<8x96xf32> to vector<8x32xf32>
    %439 = arith.addf %437, %438 : vector<8x32xf32>
    %cst_162 = arith.constant 5.000000e-01 : f32
    %440 = vector.broadcast %cst_162 : f32 to vector<8x32xf32>
    %441 = arith.mulf %440, %439 : vector<8x32xf32>
    %442 = math.tanh %441 : vector<8x32xf32>
    %cst_163 = arith.constant 5.000000e-01 : f32
    %443 = vector.broadcast %cst_163 : f32 to vector<8x32xf32>
    %444 = arith.mulf %443, %442 : vector<8x32xf32>
    %cst_164 = arith.constant 5.000000e-01 : f32
    %445 = vector.broadcast %cst_164 : f32 to vector<8x32xf32>
    %446 = arith.subf %445, %444 : vector<8x32xf32>
    %447 = arith.mulf %426, %446 : vector<8x32xf32>
    %448 = arith.mulf %426, %384 : vector<8x32xf32>
    %449 = vector.extract_strided_slice %425 {offsets = [0, 64], sizes = [8, 32], strides = [1, 1]} : vector<8x96xf32> to vector<8x32xf32>
    %450 = vector.extract_strided_slice %389 {offsets = [0, 64], sizes = [8, 32], strides = [1, 1]} : vector<8x96xf32> to vector<8x32xf32>
    %451 = vector.broadcast %15 : vector<1x32xf32> to vector<8x32xf32>
    %452 = arith.addf %450, %451 : vector<8x32xf32>
    %453 = arith.mulf %436, %452 : vector<8x32xf32>
    %454 = arith.addf %449, %453 : vector<8x32xf32>
    %455 = math.tanh %454 : vector<8x32xf32>
    %456 = arith.subf %455, %384 : vector<8x32xf32>
    %457 = arith.mulf %447, %456 : vector<8x32xf32>
    %458 = arith.addf %384, %457 : vector<8x32xf32>
    %459 = arith.addf %448, %457 : vector<8x32xf32>
    %c40_165 = arith.constant 40 : index
    %c0_166 = arith.constant 0 : index
    %460 = vector.load %arg13[%c40_165, %c0_166] : memref<64x64xf32, #tpu.memory_space<vmem>>, vector<8x32xf32>
    tpu.vector_store %arg13[%c40_165, %c0_166], %424 {strides = array<i32>} : memref<64x64xf32, #tpu.memory_space<vmem>>, vector<8x32xf32>,
    %c16_167 = arith.constant 16 : index
    %c32_168 = arith.constant 32 : index
    %461 = vector.load %arg13[%c16_167, %c32_168] : memref<64x64xf32, #tpu.memory_space<vmem>>, vector<8x32xf32>
    tpu.vector_store %arg13[%c16_167, %c32_168], %459 {strides = array<i32>} : memref<64x64xf32, #tpu.memory_space<vmem>>, vector<8x32xf32>,
    %cst_169 = arith.constant dense<0.000000e+00> : vector<8x96xf32>
    %462 = tpu.matmul %423, %12, %cst_169 {dimension_numbers = #tpu.dot_dimension_numbers<[1], [0], [0], [1], [0, 0, 1, 1], [], []>} : vector<8x32xf32>, vector<32x96xf32>, vector<8x96xf32> -> vector<8x96xf32>
    %cst_170 = arith.constant dense<0.000000e+00> : vector<8x96xf32>
    %463 = tpu.matmul %458, %13, %cst_170 {dimension_numbers = #tpu.dot_dimension_numbers<[1], [0], [0], [1], [0, 0, 1, 1], [], []>} : vector<8x32xf32>, vector<32x96xf32>, vector<8x96xf32> -> vector<8x96xf32>
    %c48_171 = arith.constant 48 : index
    %c0_172 = arith.constant 0 : index
    %464 = vector.load %arg11[%c48_171, %c0_172] : memref<64x96xf32, #tpu.memory_space<vmem>>, vector<8x96xf32>
    %c48_173 = arith.constant 48 : index
    %c0_174 = arith.constant 0 : index
    %465 = vector.load %arg1[%c48_173, %c0_174] : memref<64x32xf32, #tpu.memory_space<vmem>>, vector<8x32xf32>
    %466 = vector.extract_strided_slice %464 {offsets = [0, 0], sizes = [8, 32], strides = [1, 1]} : vector<8x96xf32> to vector<8x32xf32>
    %467 = vector.extract_strided_slice %462 {offsets = [0, 0], sizes = [8, 32], strides = [1, 1]} : vector<8x96xf32> to vector<8x32xf32>
    %468 = arith.addf %466, %467 : vector<8x32xf32>
    %cst_175 = arith.constant 5.000000e-01 : f32
    %469 = vector.broadcast %cst_175 : f32 to vector<8x32xf32>
    %470 = arith.mulf %469, %468 : vector<8x32xf32>
    %471 = math.tanh %470 : vector<8x32xf32>
    %cst_176 = arith.constant 5.000000e-01 : f32
    %472 = vector.broadcast %cst_176 : f32 to vector<8x32xf32>
    %473 = arith.mulf %472, %471 : vector<8x32xf32>
    %cst_177 = arith.constant 5.000000e-01 : f32
    %474 = vector.broadcast %cst_177 : f32 to vector<8x32xf32>
    %475 = arith.addf %474, %473 : vector<8x32xf32>
    %476 = vector.extract_strided_slice %464 {offsets = [0, 32], sizes = [8, 32], strides = [1, 1]} : vector<8x96xf32> to vector<8x32xf32>
    %477 = vector.extract_strided_slice %462 {offsets = [0, 32], sizes = [8, 32], strides = [1, 1]} : vector<8x96xf32> to vector<8x32xf32>
    %478 = arith.addf %476, %477 : vector<8x32xf32>
    %cst_178 = arith.constant 5.000000e-01 : f32
    %479 = vector.broadcast %cst_178 : f32 to vector<8x32xf32>
    %480 = arith.mulf %479, %478 : vector<8x32xf32>
    %481 = math.tanh %480 : vector<8x32xf32>
    %cst_179 = arith.constant 5.000000e-01 : f32
    %482 = vector.broadcast %cst_179 : f32 to vector<8x32xf32>
    %483 = arith.mulf %482, %481 : vector<8x32xf32>
    %cst_180 = arith.constant 5.000000e-01 : f32
    %484 = vector.broadcast %cst_180 : f32 to vector<8x32xf32>
    %485 = arith.subf %484, %483 : vector<8x32xf32>
    %486 = arith.mulf %465, %485 : vector<8x32xf32>
    %487 = arith.mulf %465, %423 : vector<8x32xf32>
    %488 = vector.extract_strided_slice %464 {offsets = [0, 64], sizes = [8, 32], strides = [1, 1]} : vector<8x96xf32> to vector<8x32xf32>
    %489 = vector.extract_strided_slice %462 {offsets = [0, 64], sizes = [8, 32], strides = [1, 1]} : vector<8x96xf32> to vector<8x32xf32>
    %490 = vector.broadcast %14 : vector<1x32xf32> to vector<8x32xf32>
    %491 = arith.addf %489, %490 : vector<8x32xf32>
    %492 = arith.mulf %475, %491 : vector<8x32xf32>
    %493 = arith.addf %488, %492 : vector<8x32xf32>
    %494 = math.tanh %493 : vector<8x32xf32>
    %495 = arith.subf %494, %423 : vector<8x32xf32>
    %496 = arith.mulf %486, %495 : vector<8x32xf32>
    %497 = arith.addf %423, %496 : vector<8x32xf32>
    %498 = arith.addf %487, %496 : vector<8x32xf32>
    %c8_181 = arith.constant 8 : index
    %c0_182 = arith.constant 0 : index
    %499 = vector.load %arg12[%c8_181, %c0_182] : memref<64x96xf32, #tpu.memory_space<vmem>>, vector<8x96xf32>
    %c8_183 = arith.constant 8 : index
    %c0_184 = arith.constant 0 : index
    %500 = vector.load %arg1[%c8_183, %c0_184] : memref<64x32xf32, #tpu.memory_space<vmem>>, vector<8x32xf32>
    %501 = vector.extract_strided_slice %499 {offsets = [0, 0], sizes = [8, 32], strides = [1, 1]} : vector<8x96xf32> to vector<8x32xf32>
    %502 = vector.extract_strided_slice %463 {offsets = [0, 0], sizes = [8, 32], strides = [1, 1]} : vector<8x96xf32> to vector<8x32xf32>
    %503 = arith.addf %501, %502 : vector<8x32xf32>
    %cst_185 = arith.constant 5.000000e-01 : f32
    %504 = vector.broadcast %cst_185 : f32 to vector<8x32xf32>
    %505 = arith.mulf %504, %503 : vector<8x32xf32>
    %506 = math.tanh %505 : vector<8x32xf32>
    %cst_186 = arith.constant 5.000000e-01 : f32
    %507 = vector.broadcast %cst_186 : f32 to vector<8x32xf32>
    %508 = arith.mulf %507, %506 : vector<8x32xf32>
    %cst_187 = arith.constant 5.000000e-01 : f32
    %509 = vector.broadcast %cst_187 : f32 to vector<8x32xf32>
    %510 = arith.addf %509, %508 : vector<8x32xf32>
    %511 = vector.extract_strided_slice %499 {offsets = [0, 32], sizes = [8, 32], strides = [1, 1]} : vector<8x96xf32> to vector<8x32xf32>
    %512 = vector.extract_strided_slice %463 {offsets = [0, 32], sizes = [8, 32], strides = [1, 1]} : vector<8x96xf32> to vector<8x32xf32>
    %513 = arith.addf %511, %512 : vector<8x32xf32>
    %cst_188 = arith.constant 5.000000e-01 : f32
    %514 = vector.broadcast %cst_188 : f32 to vector<8x32xf32>
    %515 = arith.mulf %514, %513 : vector<8x32xf32>
    %516 = math.tanh %515 : vector<8x32xf32>
    %cst_189 = arith.constant 5.000000e-01 : f32
    %517 = vector.broadcast %cst_189 : f32 to vector<8x32xf32>
    %518 = arith.mulf %517, %516 : vector<8x32xf32>
    %cst_190 = arith.constant 5.000000e-01 : f32
    %519 = vector.broadcast %cst_190 : f32 to vector<8x32xf32>
    %520 = arith.subf %519, %518 : vector<8x32xf32>
    %521 = arith.mulf %500, %520 : vector<8x32xf32>
    %522 = arith.mulf %500, %458 : vector<8x32xf32>
    %523 = vector.extract_strided_slice %499 {offsets = [0, 64], sizes = [8, 32], strides = [1, 1]} : vector<8x96xf32> to vector<8x32xf32>
    %524 = vector.extract_strided_slice %463 {offsets = [0, 64], sizes = [8, 32], strides = [1, 1]} : vector<8x96xf32> to vector<8x32xf32>
    %525 = vector.broadcast %15 : vector<1x32xf32> to vector<8x32xf32>
    %526 = arith.addf %524, %525 : vector<8x32xf32>
    %527 = arith.mulf %510, %526 : vector<8x32xf32>
    %528 = arith.addf %523, %527 : vector<8x32xf32>
    %529 = math.tanh %528 : vector<8x32xf32>
    %530 = arith.subf %529, %458 : vector<8x32xf32>
    %531 = arith.mulf %521, %530 : vector<8x32xf32>
    %532 = arith.addf %458, %531 : vector<8x32xf32>
    %533 = arith.addf %522, %531 : vector<8x32xf32>
    %c48_191 = arith.constant 48 : index
    %c0_192 = arith.constant 0 : index
    %534 = vector.load %arg13[%c48_191, %c0_192] : memref<64x64xf32, #tpu.memory_space<vmem>>, vector<8x32xf32>
    tpu.vector_store %arg13[%c48_191, %c0_192], %498 {strides = array<i32>} : memref<64x64xf32, #tpu.memory_space<vmem>>, vector<8x32xf32>,
    %c8_193 = arith.constant 8 : index
    %c32_194 = arith.constant 32 : index
    %535 = vector.load %arg13[%c8_193, %c32_194] : memref<64x64xf32, #tpu.memory_space<vmem>>, vector<8x32xf32>
    tpu.vector_store %arg13[%c8_193, %c32_194], %533 {strides = array<i32>} : memref<64x64xf32, #tpu.memory_space<vmem>>, vector<8x32xf32>,
    %cst_195 = arith.constant dense<0.000000e+00> : vector<8x96xf32>
    %536 = tpu.matmul %497, %12, %cst_195 {dimension_numbers = #tpu.dot_dimension_numbers<[1], [0], [0], [1], [0, 0, 1, 1], [], []>} : vector<8x32xf32>, vector<32x96xf32>, vector<8x96xf32> -> vector<8x96xf32>
    %cst_196 = arith.constant dense<0.000000e+00> : vector<8x96xf32>
    %537 = tpu.matmul %532, %13, %cst_196 {dimension_numbers = #tpu.dot_dimension_numbers<[1], [0], [0], [1], [0, 0, 1, 1], [], []>} : vector<8x32xf32>, vector<32x96xf32>, vector<8x96xf32> -> vector<8x96xf32>
    %c56_197 = arith.constant 56 : index
    %c0_198 = arith.constant 0 : index
    %538 = vector.load %arg11[%c56_197, %c0_198] : memref<64x96xf32, #tpu.memory_space<vmem>>, vector<8x96xf32>
    %c56_199 = arith.constant 56 : index
    %c0_200 = arith.constant 0 : index
    %539 = vector.load %arg1[%c56_199, %c0_200] : memref<64x32xf32, #tpu.memory_space<vmem>>, vector<8x32xf32>
    %540 = vector.extract_strided_slice %538 {offsets = [0, 0], sizes = [8, 32], strides = [1, 1]} : vector<8x96xf32> to vector<8x32xf32>
    %541 = vector.extract_strided_slice %536 {offsets = [0, 0], sizes = [8, 32], strides = [1, 1]} : vector<8x96xf32> to vector<8x32xf32>
    %542 = arith.addf %540, %541 : vector<8x32xf32>
    %cst_201 = arith.constant 5.000000e-01 : f32
    %543 = vector.broadcast %cst_201 : f32 to vector<8x32xf32>
    %544 = arith.mulf %543, %542 : vector<8x32xf32>
    %545 = math.tanh %544 : vector<8x32xf32>
    %cst_202 = arith.constant 5.000000e-01 : f32
    %546 = vector.broadcast %cst_202 : f32 to vector<8x32xf32>
    %547 = arith.mulf %546, %545 : vector<8x32xf32>
    %cst_203 = arith.constant 5.000000e-01 : f32
    %548 = vector.broadcast %cst_203 : f32 to vector<8x32xf32>
    %549 = arith.addf %548, %547 : vector<8x32xf32>
    %550 = vector.extract_strided_slice %538 {offsets = [0, 32], sizes = [8, 32], strides = [1, 1]} : vector<8x96xf32> to vector<8x32xf32>
    %551 = vector.extract_strided_slice %536 {offsets = [0, 32], sizes = [8, 32], strides = [1, 1]} : vector<8x96xf32> to vector<8x32xf32>
    %552 = arith.addf %550, %551 : vector<8x32xf32>
    %cst_204 = arith.constant 5.000000e-01 : f32
    %553 = vector.broadcast %cst_204 : f32 to vector<8x32xf32>
    %554 = arith.mulf %553, %552 : vector<8x32xf32>
    %555 = math.tanh %554 : vector<8x32xf32>
    %cst_205 = arith.constant 5.000000e-01 : f32
    %556 = vector.broadcast %cst_205 : f32 to vector<8x32xf32>
    %557 = arith.mulf %556, %555 : vector<8x32xf32>
    %cst_206 = arith.constant 5.000000e-01 : f32
    %558 = vector.broadcast %cst_206 : f32 to vector<8x32xf32>
    %559 = arith.subf %558, %557 : vector<8x32xf32>
    %560 = arith.mulf %539, %559 : vector<8x32xf32>
    %561 = arith.mulf %539, %497 : vector<8x32xf32>
    %562 = vector.extract_strided_slice %538 {offsets = [0, 64], sizes = [8, 32], strides = [1, 1]} : vector<8x96xf32> to vector<8x32xf32>
    %563 = vector.extract_strided_slice %536 {offsets = [0, 64], sizes = [8, 32], strides = [1, 1]} : vector<8x96xf32> to vector<8x32xf32>
    %564 = vector.broadcast %14 : vector<1x32xf32> to vector<8x32xf32>
    %565 = arith.addf %563, %564 : vector<8x32xf32>
    %566 = arith.mulf %549, %565 : vector<8x32xf32>
    %567 = arith.addf %562, %566 : vector<8x32xf32>
    %568 = math.tanh %567 : vector<8x32xf32>
    %569 = arith.subf %568, %497 : vector<8x32xf32>
    %570 = arith.mulf %560, %569 : vector<8x32xf32>
    %571 = arith.addf %561, %570 : vector<8x32xf32>
    %c0_207 = arith.constant 0 : index
    %c0_208 = arith.constant 0 : index
    %572 = vector.load %arg12[%c0_207, %c0_208] : memref<64x96xf32, #tpu.memory_space<vmem>>, vector<8x96xf32>
    %c0_209 = arith.constant 0 : index
    %c0_210 = arith.constant 0 : index
    %573 = vector.load %arg1[%c0_209, %c0_210] : memref<64x32xf32, #tpu.memory_space<vmem>>, vector<8x32xf32>
    %574 = vector.extract_strided_slice %572 {offsets = [0, 0], sizes = [8, 32], strides = [1, 1]} : vector<8x96xf32> to vector<8x32xf32>
    %575 = vector.extract_strided_slice %537 {offsets = [0, 0], sizes = [8, 32], strides = [1, 1]} : vector<8x96xf32> to vector<8x32xf32>
    %576 = arith.addf %574, %575 : vector<8x32xf32>
    %cst_211 = arith.constant 5.000000e-01 : f32
    %577 = vector.broadcast %cst_211 : f32 to vector<8x32xf32>
    %578 = arith.mulf %577, %576 : vector<8x32xf32>
    %579 = math.tanh %578 : vector<8x32xf32>
    %cst_212 = arith.constant 5.000000e-01 : f32
    %580 = vector.broadcast %cst_212 : f32 to vector<8x32xf32>
    %581 = arith.mulf %580, %579 : vector<8x32xf32>
    %cst_213 = arith.constant 5.000000e-01 : f32
    %582 = vector.broadcast %cst_213 : f32 to vector<8x32xf32>
    %583 = arith.addf %582, %581 : vector<8x32xf32>
    %584 = vector.extract_strided_slice %572 {offsets = [0, 32], sizes = [8, 32], strides = [1, 1]} : vector<8x96xf32> to vector<8x32xf32>
    %585 = vector.extract_strided_slice %537 {offsets = [0, 32], sizes = [8, 32], strides = [1, 1]} : vector<8x96xf32> to vector<8x32xf32>
    %586 = arith.addf %584, %585 : vector<8x32xf32>
    %cst_214 = arith.constant 5.000000e-01 : f32
    %587 = vector.broadcast %cst_214 : f32 to vector<8x32xf32>
    %588 = arith.mulf %587, %586 : vector<8x32xf32>
    %589 = math.tanh %588 : vector<8x32xf32>
    %cst_215 = arith.constant 5.000000e-01 : f32
    %590 = vector.broadcast %cst_215 : f32 to vector<8x32xf32>
    %591 = arith.mulf %590, %589 : vector<8x32xf32>
    %cst_216 = arith.constant 5.000000e-01 : f32
    %592 = vector.broadcast %cst_216 : f32 to vector<8x32xf32>
    %593 = arith.subf %592, %591 : vector<8x32xf32>
    %594 = arith.mulf %573, %593 : vector<8x32xf32>
    %595 = arith.mulf %573, %532 : vector<8x32xf32>
    %596 = vector.extract_strided_slice %572 {offsets = [0, 64], sizes = [8, 32], strides = [1, 1]} : vector<8x96xf32> to vector<8x32xf32>
    %597 = vector.extract_strided_slice %537 {offsets = [0, 64], sizes = [8, 32], strides = [1, 1]} : vector<8x96xf32> to vector<8x32xf32>
    %598 = vector.broadcast %15 : vector<1x32xf32> to vector<8x32xf32>
    %599 = arith.addf %597, %598 : vector<8x32xf32>
    %600 = arith.mulf %583, %599 : vector<8x32xf32>
    %601 = arith.addf %596, %600 : vector<8x32xf32>
    %602 = math.tanh %601 : vector<8x32xf32>
    %603 = arith.subf %602, %532 : vector<8x32xf32>
    %604 = arith.mulf %594, %603 : vector<8x32xf32>
    %605 = arith.addf %595, %604 : vector<8x32xf32>
    %c56_217 = arith.constant 56 : index
    %c0_218 = arith.constant 0 : index
    %606 = vector.load %arg13[%c56_217, %c0_218] : memref<64x64xf32, #tpu.memory_space<vmem>>, vector<8x32xf32>
    tpu.vector_store %arg13[%c56_217, %c0_218], %571 {strides = array<i32>} : memref<64x64xf32, #tpu.memory_space<vmem>>, vector<8x32xf32>,
    %c0_219 = arith.constant 0 : index
    %c32_220 = arith.constant 32 : index
    %607 = vector.load %arg13[%c0_219, %c32_220] : memref<64x64xf32, #tpu.memory_space<vmem>>, vector<8x32xf32>
    tpu.vector_store %arg13[%c0_219, %c32_220], %605 {strides = array<i32>} : memref<64x64xf32, #tpu.memory_space<vmem>>, vector<8x32xf32>,
    %c0_221 = arith.constant 0 : index
    %c0_222 = arith.constant 0 : index
    %608 = vector.load %arg13[%c0_221, %c0_222] : memref<64x64xf32, #tpu.memory_space<vmem>>, vector<64x64xf32>
    %c0_223 = arith.constant 0 : index
    %c0_224 = arith.constant 0 : index
    %609 = vector.load %arg8[%c0_223, %c0_224] : memref<64x8xf32, #tpu.memory_space<vmem>>, vector<64x8xf32>
    %cst_225 = arith.constant dense<0.000000e+00> : vector<64x8xf32>
    %610 = tpu.matmul %608, %609, %cst_225 {dimension_numbers = #tpu.dot_dimension_numbers<[1], [0], [0], [1], [0, 0, 1, 1], [], []>} : vector<64x64xf32>, vector<64x8xf32>, vector<64x8xf32> -> vector<64x8xf32>
    %c0_226 = arith.constant 0 : index
    %c0_227 = arith.constant 0 : index
    %611 = vector.load %arg9[%c0_226, %c0_227] : memref<1x8xf32, #tpu.memory_space<vmem>>, vector<1x8xf32>
    %612 = vector.broadcast %611 : vector<1x8xf32> to vector<64x8xf32>
    %613 = arith.addf %610, %612 : vector<64x8xf32>
    %c0_228 = arith.constant 0 : index
    %c0_229 = arith.constant 0 : index
    %614 = vector.load %arg10[%c0_228, %c0_229] : memref<64x8xf32, #tpu.memory_space<vmem>>, vector<64x8xf32>
    tpu.vector_store %arg10[%c0_228, %c0_229], %613 {strides = array<i32>} : memref<64x8xf32, #tpu.memory_space<vmem>>, vector<64x8xf32>,
    return
  }
}

</mosaic_0001>

<llo_original>
// kernel: tpu_custom_call.1
$region0: #{tpu_custom_call.1}
  #allocation0 [shape = 'u32[]', space=smem, size = 0x4, offset = 0x4, fixed_abs, tag = 'smem constant byte address 0x4 - core index']
  #allocation1 [shape = 'u32[72,128]{1,0:T(1,128)}', space=vmem, size = 0x9000, scoped, tag = 'internal scratch']
  #allocation2 [shape = 'f32[64,96]{1,0:T(8,128)}', space=vmem, size = 0x8000, scoped, tag = 'scratch operand']
  #allocation3 [shape = 'f32[64,96]{1,0:T(8,128)}', space=vmem, size = 0x8000, scoped, tag = 'scratch operand']
  #allocation4 [shape = 'f32[64,64]{1,0:T(8,128)}', space=vmem, size = 0x8000, scoped, tag = 'scratch operand']
  %s0 = inlined_call_operand.vmem [shape: s32[64,1], index: 0, kind: input, shape index: {}]
  %s1 = inlined_call_operand.vmem [shape: f32[64,32], index: 1, kind: input, shape index: {}]
  %s2 = inlined_call_operand.vmem [shape: f32[56,96], index: 2, kind: input, shape index: {}]
  %s3 = inlined_call_operand.vmem [shape: f32[56,96], index: 3, kind: input, shape index: {}]
  %s4 = inlined_call_operand.vmem [shape: f32[32,96], index: 4, kind: input, shape index: {}]
  %s5 = inlined_call_operand.vmem [shape: f32[32,96], index: 5, kind: input, shape index: {}]
  %s6 = inlined_call_operand.vmem [shape: f32[1,32], index: 6, kind: input, shape index: {}]
  %s7 = inlined_call_operand.vmem [shape: f32[1,32], index: 7, kind: input, shape index: {}]
  %s8 = inlined_call_operand.vmem [shape: f32[64,8], index: 8, kind: input, shape index: {}]
  %s9 = inlined_call_operand.vmem [shape: f32[1,8], index: 9, kind: input, shape index: {}]
  %s10 = inlined_call_operand.vmem [shape: f32[64,8], index: 10, kind: output, shape index: {}]
  %s11 = sld [smem:[#allocation0]]
  $region50: #{tpu_custom_call.1} parent=0
    _
  %s13 = ssub.s32 1, %s11
  %s14 = scalar_select 0, %s13, %s11
  // Predicated region
  $region2: #{tpu_custom_call.1} parent=0 // pred_check
    _
  $region3: #{tpu_custom_call.1} parent=0 // pred_check_branch
    %16 = sbr.rel (0) target = $region5
  $region4: #{tpu_custom_call.1} parent=0 // pred_region
    _
  $region5: #{tpu_custom_call.1} parent=0 // pred_fallthru
    _
  // Predicated region
  $region6: #{tpu_custom_call.1} parent=0 // pred_check
    _
  $region7: #{tpu_custom_call.1} parent=0 // pred_check_branch
    %18 = sbr.rel (0) target = $region9
  $region8: #{tpu_custom_call.1} parent=0 // pred_region
    _
  $region9: #{tpu_custom_call.1} parent=0 // pred_fallthru
    _
  // Predicated region
  $region10: #{tpu_custom_call.1} parent=0 // pred_check
    _
  $region11: #{tpu_custom_call.1} parent=0 // pred_check_branch
    %20 = sbr.rel (0) target = $region13
  $region12: #{tpu_custom_call.1} parent=0 // pred_region
    _
  $region13: #{tpu_custom_call.1} parent=0 // pred_fallthru
    _
  // Predicated region
  $region14: #{tpu_custom_call.1} parent=0 // pred_check
    _
  $region15: #{tpu_custom_call.1} parent=0 // pred_check_branch
    %22 = sbr.rel (0) target = $region17
  $region16: #{tpu_custom_call.1} parent=0 // pred_region
    _
  $region17: #{tpu_custom_call.1} parent=0 // pred_fallthru
    _
  // Predicated region
  $region18: #{tpu_custom_call.1} parent=0 // pred_check
    _
  $region19: #{tpu_custom_call.1} parent=0 // pred_check_branch
    %24 = sbr.rel (0) target = $region21
  $region20: #{tpu_custom_call.1} parent=0 // pred_region
    _
  $region21: #{tpu_custom_call.1} parent=0 // pred_fallthru
    _
  // Predicated region
  $region22: #{tpu_custom_call.1} parent=0 // pred_check
    _
  $region23: #{tpu_custom_call.1} parent=0 // pred_check_branch
    %26 = sbr.rel (0) target = $region25
  $region24: #{tpu_custom_call.1} parent=0 // pred_region
    _
  $region25: #{tpu_custom_call.1} parent=0 // pred_fallthru
    _
  // Predicated region
  $region26: #{tpu_custom_call.1} parent=0 // pred_check
    _
  $region27: #{tpu_custom_call.1} parent=0 // pred_check_branch
    %28 = sbr.rel (0) target = $region29
  $region28: #{tpu_custom_call.1} parent=0 // pred_region
    _
  $region29: #{tpu_custom_call.1} parent=0 // pred_fallthru
    _
  // Predicated region
  $region30: #{tpu_custom_call.1} parent=0 // pred_check
    _
  $region31: #{tpu_custom_call.1} parent=0 // pred_check_branch
    %30 = sbr.rel (0) target = $region33
  $region32: #{tpu_custom_call.1} parent=0 // pred_region
    _
  $region33: #{tpu_custom_call.1} parent=0 // pred_fallthru
    _
  // Predicated region
  $region34: #{tpu_custom_call.1} parent=0 // pred_check
    _
  $region35: #{tpu_custom_call.1} parent=0 // pred_check_branch
    %32 = sbr.rel (0) target = $region37
  $region36: #{tpu_custom_call.1} parent=0 // pred_region
    _
  $region37: #{tpu_custom_call.1} parent=0 // pred_fallthru
    _
  // Predicated region
  $region38: #{tpu_custom_call.1} parent=0 // pred_check
    _
  $region39: #{tpu_custom_call.1} parent=0 // pred_check_branch
    %34 = sbr.rel (0) target = $region41
  $region40: #{tpu_custom_call.1} parent=0 // pred_region
    _
  $region41: #{tpu_custom_call.1} parent=0 // pred_fallthru
    _
  %v35 = vld [vmem:[%s0] sm:$0xff]
  %v36 = vld [vmem:[%s0 + $0x8] sm:$0xff]
  %v37 = vld [vmem:[%s0 + $0x10] sm:$0xff]
  %v38 = vld [vmem:[%s0 + $0x18] sm:$0xff]
  %v39 = vld [vmem:[%s0 + $0x20] sm:$0xff]
  %v40 = vld [vmem:[%s0 + $0x28] sm:$0xff]
  %v41 = vld [vmem:[%s0 + $0x30] sm:$0xff]
  %v42 = vld [vmem:[%s0 + $0x38] sm:$0xff]
  %v43 = vlaneseq
  %v44 = vand.u32 %v43, 127
  %45 = vset.pattern.permute.xlu0 0
  %46 = vperm.xlu0 %45, %v35
  %v47 = vpop.permute.xlu0 %46
  %48 = vset.pattern.permute.xlu0 0
  %49 = vperm.xlu0 %48, %v36
  %v50 = vpop.permute.xlu0 %49
  %51 = vset.pattern.permute.xlu0 0
  %52 = vperm.xlu0 %51, %v37
  %v53 = vpop.permute.xlu0 %52
  %54 = vset.pattern.permute.xlu0 0
  %55 = vperm.xlu0 %54, %v38
  %v56 = vpop.permute.xlu0 %55
  %57 = vset.pattern.permute.xlu0 0
  %58 = vperm.xlu0 %57, %v39
  %v59 = vpop.permute.xlu0 %58
  %60 = vset.pattern.permute.xlu0 0
  %61 = vperm.xlu0 %60, %v40
  %v62 = vpop.permute.xlu0 %61
  %63 = vset.pattern.permute.xlu0 0
  %64 = vperm.xlu0 %63, %v41
  %v65 = vpop.permute.xlu0 %64
  %66 = vset.pattern.permute.xlu0 0
  %67 = vperm.xlu0 %66, %v42
  %v68 = vpop.permute.xlu0 %67
  %vm69 = vcmp.eq.s32.totalorder %v44, %v47
  %vm70 = vcmp.eq.s32.totalorder %v44, %v50
  %vm71 = vcmp.eq.s32.totalorder %v44, %v53
  %vm72 = vcmp.eq.s32.totalorder %v44, %v56
  %vm73 = vcmp.eq.s32.totalorder %v44, %v59
  %vm74 = vcmp.eq.s32.totalorder %v44, %v62
  %vm75 = vcmp.eq.s32.totalorder %v44, %v65
  %vm76 = vcmp.eq.s32.totalorder %v44, %v68
  %v77 = vsel %vm69, 1, 0
  %v78 = vsel %vm70, 1, 0
  %v79 = vsel %vm71, 1, 0
  %v80 = vsel %vm72, 1, 0
  %v81 = vsel %vm73, 1, 0
  %v82 = vsel %vm74, 1, 0
  %v83 = vsel %vm75, 1, 0
  %v84 = vsel %vm76, 1, 0
  %v85 = vcvt.s32.f32 %v77
  %v86 = vcvt.s32.f32 %v78
  %v87 = vcvt.s32.f32 %v79
  %v88 = vcvt.s32.f32 %v80
  %v89 = vcvt.s32.f32 %v81
  %v90 = vcvt.s32.f32 %v82
  %v91 = vcvt.s32.f32 %v83
  %v92 = vcvt.s32.f32 %v84
  %v93 = vld [vmem:[%s2] sm:$0xff]
  %v94 = vld [vmem:[%s2 + $0x8] sm:$0xff]
  %v95 = vld [vmem:[%s2 + $0x10] sm:$0xff]
  %v96 = vld [vmem:[%s2 + $0x18] sm:$0xff]
  %v97 = vld [vmem:[%s2 + $0x20] sm:$0xff]
  %v98 = vld [vmem:[%s2 + $0x28] sm:$0xff]
  %v99 = vld [vmem:[%s2 + $0x30] sm:$0xff]
  %vm100 = vcmask 457728
  %v102 = vsel %vm100, %v85, 0
  %v105 = vsel %vm100, %v86, 0
  %v108 = vsel %vm100, %v87, 0
  %v111 = vsel %vm100, %v88, 0
  %v114 = vsel %vm100, %v89, 0
  %v117 = vsel %vm100, %v90, 0
  %v120 = vsel %vm100, %v91, 0
  %v123 = vsel %vm100, %v92, 0
  %125 = vmatpush.msra.mxu0 0.0
  %126 = vmatpush.msra.mxu0 0.0
  %127 = vmatpush.msra.mxu0 0.0
  %128 = vmatpush.msra.mxu0 0.0
  %129 = vmatpush.msra.mxu0 0.0
  %130 = vmatpush.msra.mxu0 0.0
  %131 = vmatpush.msra.mxu0 0.0
  %132 = vmatpush.msra.mxu0 0.0
  %133 = vmatpush.msra.mxu0 0.0
  %134 = vmatpush.msra.mxu0 %v99
  %135 = vmatpush.msra.mxu0 %v98
  %136 = vmatpush.msra.mxu0 %v97
  %137 = vmatpush.msra.mxu0 %v96
  %138 = vmatpush.msra.mxu0 %v95
  %139 = vmatpush.msra.mxu0 %v94
  %140 = vmatpush.msra.mxu0 %v93
  %141 = vmatmul.f32.gmra.mxu0 %v102
  %v142 = vpop.f32.mrf.mxu0
  %v143 = vadd.f32 0.0, %v142
  %144 = vmatmul.f32.gmra.mxu0 %v105
  %v145 = vpop.f32.mrf.mxu0
  %v146 = vadd.f32 0.0, %v145
  %147 = vmatmul.f32.gmra.mxu0 %v108
  %v148 = vpop.f32.mrf.mxu0
  %v149 = vadd.f32 0.0, %v148
  %150 = vmatmul.f32.gmra.mxu0 %v111
  %v151 = vpop.f32.mrf.mxu0
  %v152 = vadd.f32 0.0, %v151
  %153 = vmatmul.f32.gmra.mxu0 %v114
  %v154 = vpop.f32.mrf.mxu0
  %v155 = vadd.f32 0.0, %v154
  %156 = vmatmul.f32.gmra.mxu0 %v117
  %v157 = vpop.f32.mrf.mxu0
  %v158 = vadd.f32 0.0, %v157
  %159 = vmatmul.f32.gmra.mxu0 %v120
  %v160 = vpop.f32.mrf.mxu0
  %v161 = vadd.f32 0.0, %v160
  %162 = vmatmul.f32.gmra.mxu0 %v123
  %v163 = vpop.f32.mrf.mxu0
  %v164 = vadd.f32 0.0, %v163
  %165 = vdwg.mxu0
  %vm166 = vcmask 785408
  %167 = vst.msk [vmem:[#allocation2] sm:$0xff] %vm166, %v143
  %168 = vst.msk [vmem:[#allocation2 + $0x8] sm:$0xff] %vm166, %v146
  %169 = vst.msk [vmem:[#allocation2 + $0x10] sm:$0xff] %vm166, %v149
  %170 = vst.msk [vmem:[#allocation2 + $0x18] sm:$0xff] %vm166, %v152
  %171 = vst.msk [vmem:[#allocation2 + $0x20] sm:$0xff] %vm166, %v155
  %172 = vst.msk [vmem:[#allocation2 + $0x28] sm:$0xff] %vm166, %v158
  %173 = vst.msk [vmem:[#allocation2 + $0x30] sm:$0xff] %vm166, %v161
  %174 = vst.msk [vmem:[#allocation2 + $0x38] sm:$0xff] %vm166, %v164
  %v175 = vld [vmem:[%s3] sm:$0xff]
  %v176 = vld [vmem:[%s3 + $0x8] sm:$0xff]
  %v177 = vld [vmem:[%s3 + $0x10] sm:$0xff]
  %v178 = vld [vmem:[%s3 + $0x18] sm:$0xff]
  %v179 = vld [vmem:[%s3 + $0x20] sm:$0xff]
  %v180 = vld [vmem:[%s3 + $0x28] sm:$0xff]
  %v181 = vld [vmem:[%s3 + $0x30] sm:$0xff]
  %182 = vmatpush.msra.mxu0 0.0
  %183 = vmatpush.msra.mxu0 0.0
  %184 = vmatpush.msra.mxu0 0.0
  %185 = vmatpush.msra.mxu0 0.0
  %186 = vmatpush.msra.mxu0 0.0
  %187 = vmatpush.msra.mxu0 0.0
  %188 = vmatpush.msra.mxu0 0.0
  %189 = vmatpush.msra.mxu0 0.0
  %190 = vmatpush.msra.mxu0 0.0
  %191 = vmatpush.msra.mxu0 %v181
  %192 = vmatpush.msra.mxu0 %v180
  %193 = vmatpush.msra.mxu0 %v179
  %194 = vmatpush.msra.mxu0 %v178
  %195 = vmatpush.msra.mxu0 %v177
  %196 = vmatpush.msra.mxu0 %v176
  %197 = vmatpush.msra.mxu0 %v175
  %198 = vmatmul.f32.gmra.mxu0 %v102
  %v199 = vpop.f32.mrf.mxu0
  %v200 = vadd.f32 0.0, %v199
  %201 = vmatmul.f32.gmra.mxu0 %v105
  %v202 = vpop.f32.mrf.mxu0
  %v203 = vadd.f32 0.0, %v202
  %204 = vmatmul.f32.gmra.mxu0 %v108
  %v205 = vpop.f32.mrf.mxu0
  %v206 = vadd.f32 0.0, %v205
  %207 = vmatmul.f32.gmra.mxu0 %v111
  %v208 = vpop.f32.mrf.mxu0
  %v209 = vadd.f32 0.0, %v208
  %210 = vmatmul.f32.gmra.mxu0 %v114
  %v211 = vpop.f32.mrf.mxu0
  %v212 = vadd.f32 0.0, %v211
  %213 = vmatmul.f32.gmra.mxu0 %v117
  %v214 = vpop.f32.mrf.mxu0
  %v215 = vadd.f32 0.0, %v214
  %216 = vmatmul.f32.gmra.mxu0 %v120
  %v217 = vpop.f32.mrf.mxu0
  %v218 = vadd.f32 0.0, %v217
  %219 = vmatmul.f32.gmra.mxu0 %v123
  %v220 = vpop.f32.mrf.mxu0
  %v221 = vadd.f32 0.0, %v220
  %222 = vdwg.mxu0
  %223 = vst.msk [vmem:[#allocation3] sm:$0xff] %vm166, %v200
  %224 = vst.msk [vmem:[#allocation3 + $0x8] sm:$0xff] %vm166, %v203
  %225 = vst.msk [vmem:[#allocation3 + $0x10] sm:$0xff] %vm166, %v206
  %226 = vst.msk [vmem:[#allocation3 + $0x18] sm:$0xff] %vm166, %v209
  %227 = vst.msk [vmem:[#allocation3 + $0x20] sm:$0xff] %vm166, %v212
  %228 = vst.msk [vmem:[#allocation3 + $0x28] sm:$0xff] %vm166, %v215
  %229 = vst.msk [vmem:[#allocation3 + $0x30] sm:$0xff] %vm166, %v218
  %230 = vst.msk [vmem:[#allocation3 + $0x38] sm:$0xff] %vm166, %v221
  %v231 = vld [vmem:[%s4] sm:$0xff]
  %v232 = vld [vmem:[%s4 + $0x8] sm:$0xff]
  %v233 = vld [vmem:[%s4 + $0x10] sm:$0xff]
  %v234 = vld [vmem:[%s4 + $0x18] sm:$0xff]
  %v235 = vld [vmem:[%s5] sm:$0xff]
  %v236 = vld [vmem:[%s5 + $0x8] sm:$0xff]
  %v237 = vld [vmem:[%s5 + $0x10] sm:$0xff]
  %v238 = vld [vmem:[%s5 + $0x18] sm:$0xff]
  %v239 = vld [vmem:[%s6] sm:$0x1]
  %v240 = vld [vmem:[%s7] sm:$0x1]
  %v241 = vld [vmem:[#allocation2] sm:$0xff]
  %v242 = vld [vmem:[%s1] sm:$0xff]
  %v243 = vadd.f32 %v241, 0.0
  %v244 = vmul.f32 %v243, 0.5
  %v245 = vtanh.pop %v244
  %v246 = vmul.f32 %v245, 0.5
  %v247 = vadd.f32 %v246, 0.5
  %v248 = vsub.f32 0.5, %v246
  %250 = vrot.lane.b32.xlu0 %v248, 96
  %v251 = vpop.permute.xlu0 %250
  %v253 = vmul.f32 %v242, %v251
  %v254 = vmul.f32 %v242, 0.0
  %v256 = vperm.slane %v239, 0
  %v258 = vadd.f32 %v256, 0.0
  %v259 = vmul.f32 %v247, %v258
  %261 = vrot.lane.b32.xlu0 %v259, 64
  %v262 = vpop.permute.xlu0 %261
  %v264 = vadd.f32 %v241, %v262
  %v265 = vtanh.pop %v264
  %267 = vrot.lane.b32.xlu0 %v265, 64
  %v268 = vpop.permute.xlu0 %267
  %v270 = vmul.f32 %v253, %v268
  %v271 = vadd.f32 %v270, 0.0
  %v272 = vadd.f32 %v254, %v270
  %v273 = vld [vmem:[#allocation3 + $0x38] sm:$0xff]
  %v274 = vld [vmem:[%s1 + $0x38] sm:$0xff]
  %v275 = vadd.f32 %v273, 0.0
  %v276 = vmul.f32 %v275, 0.5
  %v277 = vtanh.pop %v276
  %v278 = vmul.f32 %v277, 0.5
  %v279 = vadd.f32 %v278, 0.5
  %v280 = vsub.f32 0.5, %v278
  %282 = vrot.lane.b32.xlu0 %v280, 96
  %v283 = vpop.permute.xlu0 %282
  %v285 = vmul.f32 %v274, %v283
  %v286 = vmul.f32 %v274, 0.0
  %v288 = vperm.slane %v240, 0
  %v290 = vadd.f32 %v288, 0.0
  %v291 = vmul.f32 %v279, %v290
  %293 = vrot.lane.b32.xlu0 %v291, 64
  %v294 = vpop.permute.xlu0 %293
  %v296 = vadd.f32 %v273, %v294
  %v297 = vtanh.pop %v296
  %299 = vrot.lane.b32.xlu0 %v297, 64
  %v300 = vpop.permute.xlu0 %299
  %v302 = vmul.f32 %v285, %v300
  %v303 = vadd.f32 %v302, 0.0
  %v304 = vadd.f32 %v286, %v302
  %vm305 = vcmask 261120
  %306 = vst.msk [vmem:[#allocation4] sm:$0xff] %vm305, %v272
  %308 = vrot.lane.b32.xlu0 %v304, 32
  %v309 = vpop.permute.xlu0 %308
  %vm311 = vcmask 523520
  %312 = vst.msk [vmem:[#allocation4 + $0x38] sm:$0xff] %vm311, %v309
  %v314 = vsel %vm305, %v271, 0
  %316 = vmatpush.msra.mxu0 0.0
  %317 = vmatpush.msra.mxu0 0.0
  %318 = vmatpush.msra.mxu0 0.0
  %319 = vmatpush.msra.mxu0 0.0
  %320 = vmatpush.msra.mxu0 0.0
  %321 = vmatpush.msra.mxu0 0.0
  %322 = vmatpush.msra.mxu0 0.0
  %323 = vmatpush.msra.mxu0 0.0
  %324 = vmatpush.msra.mxu0 0.0
  %325 = vmatpush.msra.mxu0 0.0
  %326 = vmatpush.msra.mxu0 0.0
  %327 = vmatpush.msra.mxu0 0.0
  %328 = vmatpush.msra.mxu0 %v234
  %329 = vmatpush.msra.mxu0 %v233
  %330 = vmatpush.msra.mxu0 %v232
  %331 = vmatpush.msra.mxu0 %v231
  %332 = vmatmul.f32.gmra.mxu0 %v314
  %v333 = vpop.f32.mrf.mxu0
  %v334 = vadd.f32 0.0, %v333
  %335 = vdwg.mxu0
  %v337 = vsel %vm305, %v303, 0
  %339 = vmatpush.msra.mxu0 0.0
  %340 = vmatpush.msra.mxu0 0.0
  %341 = vmatpush.msra.mxu0 0.0
  %342 = vmatpush.msra.mxu0 0.0
  %343 = vmatpush.msra.mxu0 0.0
  %344 = vmatpush.msra.mxu0 0.0
  %345 = vmatpush.msra.mxu0 0.0
  %346 = vmatpush.msra.mxu0 0.0
  %347 = vmatpush.msra.mxu0 0.0
  %348 = vmatpush.msra.mxu0 0.0
  %349 = vmatpush.msra.mxu0 0.0
  %350 = vmatpush.msra.mxu0 0.0
  %351 = vmatpush.msra.mxu0 %v238
  %352 = vmatpush.msra.mxu0 %v237
  %353 = vmatpush.msra.mxu0 %v236
  %354 = vmatpush.msra.mxu0 %v235
  %355 = vmatmul.f32.gmra.mxu0 %v337
  %v356 = vpop.f32.mrf.mxu0
  %v357 = vadd.f32 0.0, %v356
  %358 = vdwg.mxu0
  %v359 = vld [vmem:[#allocation2 + $0x8] sm:$0xff]
  %v360 = vld [vmem:[%s1 + $0x8] sm:$0xff]
  %v361 = vadd.f32 %v359, %v334
  %v362 = vmul.f32 %v361, 0.5
  %v363 = vtanh.pop %v362
  %v364 = vmul.f32 %v363, 0.5
  %v365 = vadd.f32 %v364, 0.5
  %v366 = vsub.f32 0.5, %v364
  %368 = vrot.lane.b32.xlu0 %v366, 96
  %v369 = vpop.permute.xlu0 %368
  %v371 = vmul.f32 %v360, %v369
  %v372 = vmul.f32 %v360, %v271
  %373 = vrot.lane.b32.xlu0 %v256, 64
  %v374 = vpop.permute.xlu0 %373
  %v376 = vadd.f32 %v334, %v374
  %378 = vrot.lane.b32.xlu0 %v376, 64
  %v379 = vpop.permute.xlu0 %378
  %v381 = vmul.f32 %v365, %v379
  %383 = vrot.lane.b32.xlu0 %v381, 64
  %v384 = vpop.permute.xlu0 %383
  %v386 = vadd.f32 %v359, %v384
  %v387 = vtanh.pop %v386
  %388 = vrot.lane.b32.xlu0 %v271, 64
  %v389 = vpop.permute.xlu0 %388
  %v391 = vsub.f32 %v387, %v389
  %393 = vrot.lane.b32.xlu0 %v391, 64
  %v394 = vpop.permute.xlu0 %393
  %v396 = vmul.f32 %v371, %v394
  %v397 = vadd.f32 %v271, %v396
  %v398 = vadd.f32 %v372, %v396
  %v399 = vld [vmem:[#allocation3 + $0x30] sm:$0xff]
  %v400 = vld [vmem:[%s1 + $0x30] sm:$0xff]
  %v401 = vadd.f32 %v399, %v357
  %v402 = vmul.f32 %v401, 0.5
  %v403 = vtanh.pop %v402
  %v404 = vmul.f32 %v403, 0.5
  %v405 = vadd.f32 %v404, 0.5
  %v406 = vsub.f32 0.5, %v404
  %408 = vrot.lane.b32.xlu0 %v406, 96
  %v409 = vpop.permute.xlu0 %408
  %v411 = vmul.f32 %v400, %v409
  %v412 = vmul.f32 %v400, %v303
  %413 = vrot.lane.b32.xlu0 %v288, 64
  %v414 = vpop.permute.xlu0 %413
  %v416 = vadd.f32 %v357, %v414
  %418 = vrot.lane.b32.xlu0 %v416, 64
  %v419 = vpop.permute.xlu0 %418
  %v421 = vmul.f32 %v405, %v419
  %423 = vrot.lane.b32.xlu0 %v421, 64
  %v424 = vpop.permute.xlu0 %423
  %v426 = vadd.f32 %v399, %v424
  %v427 = vtanh.pop %v426
  %428 = vrot.lane.b32.xlu0 %v303, 64
  %v429 = vpop.permute.xlu0 %428
  %v431 = vsub.f32 %v427, %v429
  %433 = vrot.lane.b32.xlu0 %v431, 64
  %v434 = vpop.permute.xlu0 %433
  %v436 = vmul.f32 %v411, %v434
  %v437 = vadd.f32 %v303, %v436
  %v438 = vadd.f32 %v412, %v436
  %439 = vst.msk [vmem:[#allocation4 + $0x8] sm:$0xff] %vm305, %v398
  %441 = vrot.lane.b32.xlu0 %v438, 32
  %v442 = vpop.permute.xlu0 %441
  %444 = vst.msk [vmem:[#allocation4 + $0x30] sm:$0xff] %vm311, %v442
  %v446 = vsel %vm305, %v397, 0
  %448 = vmatpush.msra.mxu0 0.0
  %449 = vmatpush.msra.mxu0 0.0
  %450 = vmatpush.msra.mxu0 0.0
  %451 = vmatpush.msra.mxu0 0.0
  %452 = vmatpush.msra.mxu0 0.0
  %453 = vmatpush.msra.mxu0 0.0
  %454 = vmatpush.msra.mxu0 0.0
  %455 = vmatpush.msra.mxu0 0.0
  %456 = vmatpush.msra.mxu0 0.0
  %457 = vmatpush.msra.mxu0 0.0
  %458 = vmatpush.msra.mxu0 0.0
  %459 = vmatpush.msra.mxu0 0.0
  %460 = vmatpush.msra.mxu0 %v234
  %461 = vmatpush.msra.mxu0 %v233
  %462 = vmatpush.msra.mxu0 %v232
  %463 = vmatpush.msra.mxu0 %v231
  %464 = vmatmul.f32.gmra.mxu0 %v446
  %v465 = vpop.f32.mrf.mxu0
  %v466 = vadd.f32 0.0, %v465
  %467 = vdwg.mxu0
  %v469 = vsel %vm305, %v437, 0
  %471 = vmatpush.msra.mxu0 0.0
  %472 = vmatpush.msra.mxu0 0.0
  %473 = vmatpush.msra.mxu0 0.0
  %474 = vmatpush.msra.mxu0 0.0
  %475 = vmatpush.msra.mxu0 0.0
  %476 = vmatpush.msra.mxu0 0.0
  %477 = vmatpush.msra.mxu0 0.0
  %478 = vmatpush.msra.mxu0 0.0
  %479 = vmatpush.msra.mxu0 0.0
  %480 = vmatpush.msra.mxu0 0.0
  %481 = vmatpush.msra.mxu0 0.0
  %482 = vmatpush.msra.mxu0 0.0
  %483 = vmatpush.msra.mxu0 %v238
  %484 = vmatpush.msra.mxu0 %v237
  %485 = vmatpush.msra.mxu0 %v236
  %486 = vmatpush.msra.mxu0 %v235
  %487 = vmatmul.f32.gmra.mxu0 %v469
  %v488 = vpop.f32.mrf.mxu0
  %v489 = vadd.f32 0.0, %v488
  %490 = vdwg.mxu0
  %v491 = vld [vmem:[#allocation2 + $0x10] sm:$0xff]
  %v492 = vld [vmem:[%s1 + $0x10] sm:$0xff]
  %v493 = vadd.f32 %v491, %v466
  %v494 = vmul.f32 %v493, 0.5
  %v495 = vtanh.pop %v494
  %v496 = vmul.f32 %v495, 0.5
  %v497 = vadd.f32 %v496, 0.5
  %v498 = vsub.f32 0.5, %v496
  %500 = vrot.lane.b32.xlu0 %v498, 96
  %v501 = vpop.permute.xlu0 %500
  %v503 = vmul.f32 %v492, %v501
  %v504 = vmul.f32 %v492, %v397
  %v505 = vadd.f32 %v466, %v374
  %507 = vrot.lane.b32.xlu0 %v505, 64
  %v508 = vpop.permute.xlu0 %507
  %v510 = vmul.f32 %v497, %v508
  %512 = vrot.lane.b32.xlu0 %v510, 64
  %v513 = vpop.permute.xlu0 %512
  %v515 = vadd.f32 %v491, %v513
  %v516 = vtanh.pop %v515
  %517 = vrot.lane.b32.xlu0 %v397, 64
  %v518 = vpop.permute.xlu0 %517
  %v520 = vsub.f32 %v516, %v518
  %522 = vrot.lane.b32.xlu0 %v520, 64
  %v523 = vpop.permute.xlu0 %522
  %v525 = vmul.f32 %v503, %v523
  %v526 = vadd.f32 %v397, %v525
  %v527 = vadd.f32 %v504, %v525
  %v528 = vld [vmem:[#allocation3 + $0x28] sm:$0xff]
  %v529 = vld [vmem:[%s1 + $0x28] sm:$0xff]
  %v530 = vadd.f32 %v528, %v489
  %v531 = vmul.f32 %v530, 0.5
  %v532 = vtanh.pop %v531
  %v533 = vmul.f32 %v532, 0.5
  %v534 = vadd.f32 %v533, 0.5
  %v535 = vsub.f32 0.5, %v533
  %537 = vrot.lane.b32.xlu0 %v535, 96
  %v538 = vpop.permute.xlu0 %537
  %v540 = vmul.f32 %v529, %v538
  %v541 = vmul.f32 %v529, %v437
  %v542 = vadd.f32 %v489, %v414
  %544 = vrot.lane.b32.xlu0 %v542, 64
  %v545 = vpop.permute.xlu0 %544
  %v547 = vmul.f32 %v534, %v545
  %549 = vrot.lane.b32.xlu0 %v547, 64
  %v550 = vpop.permute.xlu0 %549
  %v552 = vadd.f32 %v528, %v550
  %v553 = vtanh.pop %v552
  %554 = vrot.lane.b32.xlu0 %v437, 64
  %v555 = vpop.permute.xlu0 %554
  %v557 = vsub.f32 %v553, %v555
  %559 = vrot.lane.b32.xlu0 %v557, 64
  %v560 = vpop.permute.xlu0 %559
  %v562 = vmul.f32 %v540, %v560
  %v563 = vadd.f32 %v437, %v562
  %v564 = vadd.f32 %v541, %v562
  %565 = vst.msk [vmem:[#allocation4 + $0x10] sm:$0xff] %vm305, %v527
  %567 = vrot.lane.b32.xlu0 %v564, 32
  %v568 = vpop.permute.xlu0 %567
  %570 = vst.msk [vmem:[#allocation4 + $0x28] sm:$0xff] %vm311, %v568
  %v572 = vsel %vm305, %v526, 0
  %574 = vmatpush.msra.mxu0 0.0
  %575 = vmatpush.msra.mxu0 0.0
  %576 = vmatpush.msra.mxu0 0.0
  %577 = vmatpush.msra.mxu0 0.0
  %578 = vmatpush.msra.mxu0 0.0
  %579 = vmatpush.msra.mxu0 0.0
  %580 = vmatpush.msra.mxu0 0.0
  %581 = vmatpush.msra.mxu0 0.0
  %582 = vmatpush.msra.mxu0 0.0
  %583 = vmatpush.msra.mxu0 0.0
  %584 = vmatpush.msra.mxu0 0.0
  %585 = vmatpush.msra.mxu0 0.0
  %586 = vmatpush.msra.mxu0 %v234
  %587 = vmatpush.msra.mxu0 %v233
  %588 = vmatpush.msra.mxu0 %v232
  %589 = vmatpush.msra.mxu0 %v231
  %590 = vmatmul.f32.gmra.mxu0 %v572
  %v591 = vpop.f32.mrf.mxu0
  %v592 = vadd.f32 0.0, %v591
  %593 = vdwg.mxu0
  %v595 = vsel %vm305, %v563, 0
  %597 = vmatpush.msra.mxu0 0.0
  %598 = vmatpush.msra.mxu0 0.0
  %599 = vmatpush.msra.mxu0 0.0
  %600 = vmatpush.msra.mxu0 0.0
  %601 = vmatpush.msra.mxu0 0.0
  %602 = vmatpush.msra.mxu0 0.0
  %603 = vmatpush.msra.mxu0 0.0
  %604 = vmatpush.msra.mxu0 0.0
  %605 = vmatpush.msra.mxu0 0.0
  %606 = vmatpush.msra.mxu0 0.0
  %607 = vmatpush.msra.mxu0 0.0
  %608 = vmatpush.msra.mxu0 0.0
  %609 = vmatpush.msra.mxu0 %v238
  %610 = vmatpush.msra.mxu0 %v237
  %611 = vmatpush.msra.mxu0 %v236
  %612 = vmatpush.msra.mxu0 %v235
  %613 = vmatmul.f32.gmra.mxu0 %v595
  %v614 = vpop.f32.mrf.mxu0
  %v615 = vadd.f32 0.0, %v614
  %616 = vdwg.mxu0
  %v617 = vld [vmem:[#allocation2 + $0x18] sm:$0xff]
  %v618 = vld [vmem:[%s1 + $0x18] sm:$0xff]
  %v619 = vadd.f32 %v617, %v592
  %v620 = vmul.f32 %v619, 0.5
  %v621 = vtanh.pop %v620
  %v622 = vmul.f32 %v621, 0.5
  %v623 = vadd.f32 %v622, 0.5
  %v624 = vsub.f32 0.5, %v622
  %626 = vrot.lane.b32.xlu0 %v624, 96
  %v627 = vpop.permute.xlu0 %626
  %v629 = vmul.f32 %v618, %v627
  %v630 = vmul.f32 %v618, %v526
  %v631 = vadd.f32 %v592, %v374
  %633 = vrot.lane.b32.xlu0 %v631, 64
  %v634 = vpop.permute.xlu0 %633
  %v636 = vmul.f32 %v623, %v634
  %638 = vrot.lane.b32.xlu0 %v636, 64
  %v639 = vpop.permute.xlu0 %638
  %v641 = vadd.f32 %v617, %v639
  %v642 = vtanh.pop %v641
  %643 = vrot.lane.b32.xlu0 %v526, 64
  %v644 = vpop.permute.xlu0 %643
  %v646 = vsub.f32 %v642, %v644
  %648 = vrot.lane.b32.xlu0 %v646, 64
  %v649 = vpop.permute.xlu0 %648
  %v651 = vmul.f32 %v629, %v649
  %v652 = vadd.f32 %v526, %v651
  %v653 = vadd.f32 %v630, %v651
  %v654 = vld [vmem:[#allocation3 + $0x20] sm:$0xff]
  %v655 = vld [vmem:[%s1 + $0x20] sm:$0xff]
  %v656 = vadd.f32 %v654, %v615
  %v657 = vmul.f32 %v656, 0.5
  %v658 = vtanh.pop %v657
  %v659 = vmul.f32 %v658, 0.5
  %v660 = vadd.f32 %v659, 0.5
  %v661 = vsub.f32 0.5, %v659
  %663 = vrot.lane.b32.xlu0 %v661, 96
  %v664 = vpop.permute.xlu0 %663
  %v666 = vmul.f32 %v655, %v664
  %v667 = vmul.f32 %v655, %v563
  %v668 = vadd.f32 %v615, %v414
  %670 = vrot.lane.b32.xlu0 %v668, 64
  %v671 = vpop.permute.xlu0 %670
  %v673 = vmul.f32 %v660, %v671
  %675 = vrot.lane.b32.xlu0 %v673, 64
  %v676 = vpop.permute.xlu0 %675
  %v678 = vadd.f32 %v654, %v676
  %v679 = vtanh.pop %v678
  %680 = vrot.lane.b32.xlu0 %v563, 64
  %v681 = vpop.permute.xlu0 %680
  %v683 = vsub.f32 %v679, %v681
  %685 = vrot.lane.b32.xlu0 %v683, 64
  %v686 = vpop.permute.xlu0 %685
  %v688 = vmul.f32 %v666, %v686
  %v689 = vadd.f32 %v563, %v688
  %v690 = vadd.f32 %v667, %v688
  %691 = vst.msk [vmem:[#allocation4 + $0x18] sm:$0xff] %vm305, %v653
  %693 = vrot.lane.b32.xlu0 %v690, 32
  %v694 = vpop.permute.xlu0 %693
  %696 = vst.msk [vmem:[#allocation4 + $0x20] sm:$0xff] %vm311, %v694
  %v698 = vsel %vm305, %v652, 0
  %700 = vmatpush.msra.mxu0 0.0
  %701 = vmatpush.msra.mxu0 0.0
  %702 = vmatpush.msra.mxu0 0.0
  %703 = vmatpush.msra.mxu0 0.0
  %704 = vmatpush.msra.mxu0 0.0
  %705 = vmatpush.msra.mxu0 0.0
  %706 = vmatpush.msra.mxu0 0.0
  %707 = vmatpush.msra.mxu0 0.0
  %708 = vmatpush.msra.mxu0 0.0
  %709 = vmatpush.msra.mxu0 0.0
  %710 = vmatpush.msra.mxu0 0.0
  %711 = vmatpush.msra.mxu0 0.0
  %712 = vmatpush.msra.mxu0 %v234
  %713 = vmatpush.msra.mxu0 %v233
  %714 = vmatpush.msra.mxu0 %v232
  %715 = vmatpush.msra.mxu0 %v231
  %716 = vmatmul.f32.gmra.mxu0 %v698
  %v717 = vpop.f32.mrf.mxu0
  %v718 = vadd.f32 0.0, %v717
  %719 = vdwg.mxu0
  %v721 = vsel %vm305, %v689, 0
  %723 = vmatpush.msra.mxu0 0.0
  %724 = vmatpush.msra.mxu0 0.0
  %725 = vmatpush.msra.mxu0 0.0
  %726 = vmatpush.msra.mxu0 0.0
  %727 = vmatpush.msra.mxu0 0.0
  %728 = vmatpush.msra.mxu0 0.0
  %729 = vmatpush.msra.mxu0 0.0
  %730 = vmatpush.msra.mxu0 0.0
  %731 = vmatpush.msra.mxu0 0.0
  %732 = vmatpush.msra.mxu0 0.0
  %733 = vmatpush.msra.mxu0 0.0
  %734 = vmatpush.msra.mxu0 0.0
  %735 = vmatpush.msra.mxu0 %v238
  %736 = vmatpush.msra.mxu0 %v237
  %737 = vmatpush.msra.mxu0 %v236
  %738 = vmatpush.msra.mxu0 %v235
  %739 = vmatmul.f32.gmra.mxu0 %v721
  %v740 = vpop.f32.mrf.mxu0
  %v741 = vadd.f32 0.0, %v740
  %742 = vdwg.mxu0
  %v743 = vld [vmem:[#allocation2 + $0x20] sm:$0xff]
  %v744 = vld [vmem:[%s1 + $0x20] sm:$0xff]
  %v745 = vadd.f32 %v743, %v718
  %v746 = vmul.f32 %v745, 0.5
  %v747 = vtanh.pop %v746
  %v748 = vmul.f32 %v747, 0.5
  %v749 = vadd.f32 %v748, 0.5
  %v750 = vsub.f32 0.5, %v748
  %752 = vrot.lane.b32.xlu0 %v750, 96
  %v753 = vpop.permute.xlu0 %752
  %v755 = vmul.f32 %v744, %v753
  %v756 = vmul.f32 %v744, %v652
  %v757 = vadd.f32 %v718, %v374
  %759 = vrot.lane.b32.xlu0 %v757, 64
  %v760 = vpop.permute.xlu0 %759
  %v762 = vmul.f32 %v749, %v760
  %764 = vrot.lane.b32.xlu0 %v762, 64
  %v765 = vpop.permute.xlu0 %764
  %v767 = vadd.f32 %v743, %v765
  %v768 = vtanh.pop %v767
  %769 = vrot.lane.b32.xlu0 %v652, 64
  %v770 = vpop.permute.xlu0 %769
  %v772 = vsub.f32 %v768, %v770
  %774 = vrot.lane.b32.xlu0 %v772, 64
  %v775 = vpop.permute.xlu0 %774
  %v777 = vmul.f32 %v755, %v775
  %v778 = vadd.f32 %v652, %v777
  %v779 = vadd.f32 %v756, %v777
  %v780 = vld [vmem:[#allocation3 + $0x18] sm:$0xff]
  %v781 = vld [vmem:[%s1 + $0x18] sm:$0xff]
  %v782 = vadd.f32 %v780, %v741
  %v783 = vmul.f32 %v782, 0.5
  %v784 = vtanh.pop %v783
  %v785 = vmul.f32 %v784, 0.5
  %v786 = vadd.f32 %v785, 0.5
  %v787 = vsub.f32 0.5, %v785
  %789 = vrot.lane.b32.xlu0 %v787, 96
  %v790 = vpop.permute.xlu0 %789
  %v792 = vmul.f32 %v781, %v790
  %v793 = vmul.f32 %v781, %v689
  %v794 = vadd.f32 %v741, %v414
  %796 = vrot.lane.b32.xlu0 %v794, 64
  %v797 = vpop.permute.xlu0 %796
  %v799 = vmul.f32 %v786, %v797
  %801 = vrot.lane.b32.xlu0 %v799, 64
  %v802 = vpop.permute.xlu0 %801
  %v804 = vadd.f32 %v780, %v802
  %v805 = vtanh.pop %v804
  %806 = vrot.lane.b32.xlu0 %v689, 64
  %v807 = vpop.permute.xlu0 %806
  %v809 = vsub.f32 %v805, %v807
  %811 = vrot.lane.b32.xlu0 %v809, 64
  %v812 = vpop.permute.xlu0 %811
  %v814 = vmul.f32 %v792, %v812
  %v815 = vadd.f32 %v689, %v814
  %v816 = vadd.f32 %v793, %v814
  %817 = vst.msk [vmem:[#allocation4 + $0x20] sm:$0xff] %vm305, %v779
  %819 = vrot.lane.b32.xlu0 %v816, 32
  %v820 = vpop.permute.xlu0 %819
  %822 = vst.msk [vmem:[#allocation4 + $0x18] sm:$0xff] %vm311, %v820
  %v824 = vsel %vm305, %v778, 0
  %826 = vmatpush.msra.mxu0 0.0
  %827 = vmatpush.msra.mxu0 0.0
  %828 = vmatpush.msra.mxu0 0.0
  %829 = vmatpush.msra.mxu0 0.0
  %830 = vmatpush.msra.mxu0 0.0
  %831 = vmatpush.msra.mxu0 0.0
  %832 = vmatpush.msra.mxu0 0.0
  %833 = vmatpush.msra.mxu0 0.0
  %834 = vmatpush.msra.mxu0 0.0
  %835 = vmatpush.msra.mxu0 0.0
  %836 = vmatpush.msra.mxu0 0.0
  %837 = vmatpush.msra.mxu0 0.0
  %838 = vmatpush.msra.mxu0 %v234
  %839 = vmatpush.msra.mxu0 %v233
  %840 = vmatpush.msra.mxu0 %v232
  %841 = vmatpush.msra.mxu0 %v231
  %842 = vmatmul.f32.gmra.mxu0 %v824
  %v843 = vpop.f32.mrf.mxu0
  %v844 = vadd.f32 0.0, %v843
  %845 = vdwg.mxu0
  %v847 = vsel %vm305, %v815, 0
  %849 = vmatpush.msra.mxu0 0.0
  %850 = vmatpush.msra.mxu0 0.0
  %851 = vmatpush.msra.mxu0 0.0
  %852 = vmatpush.msra.mxu0 0.0
  %853 = vmatpush.msra.mxu0 0.0
  %854 = vmatpush.msra.mxu0 0.0
  %855 = vmatpush.msra.mxu0 0.0
  %856 = vmatpush.msra.mxu0 0.0
  %857 = vmatpush.msra.mxu0 0.0
  %858 = vmatpush.msra.mxu0 0.0
  %859 = vmatpush.msra.mxu0 0.0
  %860 = vmatpush.msra.mxu0 0.0
  %861 = vmatpush.msra.mxu0 %v238
  %862 = vmatpush.msra.mxu0 %v237
  %863 = vmatpush.msra.mxu0 %v236
  %864 = vmatpush.msra.mxu0 %v235
  %865 = vmatmul.f32.gmra.mxu0 %v847
  %v866 = vpop.f32.mrf.mxu0
  %v867 = vadd.f32 0.0, %v866
  %868 = vdwg.mxu0
  %v869 = vld [vmem:[#allocation2 + $0x28] sm:$0xff]
  %v870 = vld [vmem:[%s1 + $0x28] sm:$0xff]
  %v871 = vadd.f32 %v869, %v844
  %v872 = vmul.f32 %v871, 0.5
  %v873 = vtanh.pop %v872
  %v874 = vmul.f32 %v873, 0.5
  %v875 = vadd.f32 %v874, 0.5
  %v876 = vsub.f32 0.5, %v874
  %878 = vrot.lane.b32.xlu0 %v876, 96
  %v879 = vpop.permute.xlu0 %878
  %v881 = vmul.f32 %v870, %v879
  %v882 = vmul.f32 %v870, %v778
  %v883 = vadd.f32 %v844, %v374
  %885 = vrot.lane.b32.xlu0 %v883, 64
  %v886 = vpop.permute.xlu0 %885
  %v888 = vmul.f32 %v875, %v886
  %890 = vrot.lane.b32.xlu0 %v888, 64
  %v891 = vpop.permute.xlu0 %890
  %v893 = vadd.f32 %v869, %v891
  %v894 = vtanh.pop %v893
  %895 = vrot.lane.b32.xlu0 %v778, 64
  %v896 = vpop.permute.xlu0 %895
  %v898 = vsub.f32 %v894, %v896
  %900 = vrot.lane.b32.xlu0 %v898, 64
  %v901 = vpop.permute.xlu0 %900
  %v903 = vmul.f32 %v881, %v901
  %v904 = vadd.f32 %v778, %v903
  %v905 = vadd.f32 %v882, %v903
  %v906 = vld [vmem:[#allocation3 + $0x10] sm:$0xff]
  %v907 = vld [vmem:[%s1 + $0x10] sm:$0xff]
  %v908 = vadd.f32 %v906, %v867
  %v909 = vmul.f32 %v908, 0.5
  %v910 = vtanh.pop %v909
  %v911 = vmul.f32 %v910, 0.5
  %v912 = vadd.f32 %v911, 0.5
  %v913 = vsub.f32 0.5, %v911
  %915 = vrot.lane.b32.xlu0 %v913, 96
  %v916 = vpop.permute.xlu0 %915
  %v918 = vmul.f32 %v907, %v916
  %v919 = vmul.f32 %v907, %v815
  %v920 = vadd.f32 %v867, %v414
  %922 = vrot.lane.b32.xlu0 %v920, 64
  %v923 = vpop.permute.xlu0 %922
  %v925 = vmul.f32 %v912, %v923
  %927 = vrot.lane.b32.xlu0 %v925, 64
  %v928 = vpop.permute.xlu0 %927
  %v930 = vadd.f32 %v906, %v928
  %v931 = vtanh.pop %v930
  %932 = vrot.lane.b32.xlu0 %v815, 64
  %v933 = vpop.permute.xlu0 %932
  %v935 = vsub.f32 %v931, %v933
  %937 = vrot.lane.b32.xlu0 %v935, 64
  %v938 = vpop.permute.xlu0 %937
  %v940 = vmul.f32 %v918, %v938
  %v941 = vadd.f32 %v815, %v940
  %v942 = vadd.f32 %v919, %v940
  %943 = vst.msk [vmem:[#allocation4 + $0x28] sm:$0xff] %vm305, %v905
  %945 = vrot.lane.b32.xlu0 %v942, 32
  %v946 = vpop.permute.xlu0 %945
  %948 = vst.msk [vmem:[#allocation4 + $0x10] sm:$0xff] %vm311, %v946
  %v950 = vsel %vm305, %v904, 0
  %952 = vmatpush.msra.mxu0 0.0
  %953 = vmatpush.msra.mxu0 0.0
  %954 = vmatpush.msra.mxu0 0.0
  %955 = vmatpush.msra.mxu0 0.0
  %956 = vmatpush.msra.mxu0 0.0
  %957 = vmatpush.msra.mxu0 0.0
  %958 = vmatpush.msra.mxu0 0.0
  %959 = vmatpush.msra.mxu0 0.0
  %960 = vmatpush.msra.mxu0 0.0
  %961 = vmatpush.msra.mxu0 0.0
  %962 = vmatpush.msra.mxu0 0.0
  %963 = vmatpush.msra.mxu0 0.0
  %964 = vmatpush.msra.mxu0 %v234
  %965 = vmatpush.msra.mxu0 %v233
  %966 = vmatpush.msra.mxu0 %v232
  %967 = vmatpush.msra.mxu0 %v231
  %968 = vmatmul.f32.gmra.mxu0 %v950
  %v969 = vpop.f32.mrf.mxu0
  %v970 = vadd.f32 0.0, %v969
  %971 = vdwg.mxu0
  %v973 = vsel %vm305, %v941, 0
  %975 = vmatpush.msra.mxu0 0.0
  %976 = vmatpush.msra.mxu0 0.0
  %977 = vmatpush.msra.mxu0 0.0
  %978 = vmatpush.msra.mxu0 0.0
  %979 = vmatpush.msra.mxu0 0.0
  %980 = vmatpush.msra.mxu0 0.0
  %981 = vmatpush.msra.mxu0 0.0
  %982 = vmatpush.msra.mxu0 0.0
  %983 = vmatpush.msra.mxu0 0.0
  %984 = vmatpush.msra.mxu0 0.0
  %985 = vmatpush.msra.mxu0 0.0
  %986 = vmatpush.msra.mxu0 0.0
  %987 = vmatpush.msra.mxu0 %v238
  %988 = vmatpush.msra.mxu0 %v237
  %989 = vmatpush.msra.mxu0 %v236
  %990 = vmatpush.msra.mxu0 %v235
  %991 = vmatmul.f32.gmra.mxu0 %v973
  %v992 = vpop.f32.mrf.mxu0
  %v993 = vadd.f32 0.0, %v992
  %994 = vdwg.mxu0
  %v995 = vld [vmem:[#allocation2 + $0x30] sm:$0xff]
  %v996 = vld [vmem:[%s1 + $0x30] sm:$0xff]
  %v997 = vadd.f32 %v995, %v970
  %v998 = vmul.f32 %v997, 0.5
  %v999 = vtanh.pop %v998
  %v1000 = vmul.f32 %v999, 0.5
  %v1001 = vadd.f32 %v1000, 0.5
  %v1002 = vsub.f32 0.5, %v1000
  %1004 = vrot.lane.b32.xlu0 %v1002, 96
  %v1005 = vpop.permute.xlu0 %1004
  %v1007 = vmul.f32 %v996, %v1005
  %v1008 = vmul.f32 %v996, %v904
  %v1009 = vadd.f32 %v970, %v374
  %1011 = vrot.lane.b32.xlu0 %v1009, 64
  %v1012 = vpop.permute.xlu0 %1011
  %v1014 = vmul.f32 %v1001, %v1012
  %1016 = vrot.lane.b32.xlu0 %v1014, 64
  %v1017 = vpop.permute.xlu0 %1016
  %v1019 = vadd.f32 %v995, %v1017
  %v1020 = vtanh.pop %v1019
  %1021 = vrot.lane.b32.xlu0 %v904, 64
  %v1022 = vpop.permute.xlu0 %1021
  %v1024 = vsub.f32 %v1020, %v1022
  %1026 = vrot.lane.b32.xlu0 %v1024, 64
  %v1027 = vpop.permute.xlu0 %1026
  %v1029 = vmul.f32 %v1007, %v1027
  %v1030 = vadd.f32 %v904, %v1029
  %v1031 = vadd.f32 %v1008, %v1029
  %v1032 = vld [vmem:[#allocation3 + $0x8] sm:$0xff]
  %v1033 = vld [vmem:[%s1 + $0x8] sm:$0xff]
  %v1034 = vadd.f32 %v1032, %v993
  %v1035 = vmul.f32 %v1034, 0.5
  %v1036 = vtanh.pop %v1035
  %v1037 = vmul.f32 %v1036, 0.5
  %v1038 = vadd.f32 %v1037, 0.5
  %v1039 = vsub.f32 0.5, %v1037
  %1041 = vrot.lane.b32.xlu0 %v1039, 96
  %v1042 = vpop.permute.xlu0 %1041
  %v1044 = vmul.f32 %v1033, %v1042
  %v1045 = vmul.f32 %v1033, %v941
  %v1046 = vadd.f32 %v993, %v414
  %1048 = vrot.lane.b32.xlu0 %v1046, 64
  %v1049 = vpop.permute.xlu0 %1048
  %v1051 = vmul.f32 %v1038, %v1049
  %1053 = vrot.lane.b32.xlu0 %v1051, 64
  %v1054 = vpop.permute.xlu0 %1053
  %v1056 = vadd.f32 %v1032, %v1054
  %v1057 = vtanh.pop %v1056
  %1058 = vrot.lane.b32.xlu0 %v941, 64
  %v1059 = vpop.permute.xlu0 %1058
  %v1061 = vsub.f32 %v1057, %v1059
  %1063 = vrot.lane.b32.xlu0 %v1061, 64
  %v1064 = vpop.permute.xlu0 %1063
  %v1066 = vmul.f32 %v1044, %v1064
  %v1067 = vadd.f32 %v941, %v1066
  %v1068 = vadd.f32 %v1045, %v1066
  %1069 = vst.msk [vmem:[#allocation4 + $0x30] sm:$0xff] %vm305, %v1031
  %1071 = vrot.lane.b32.xlu0 %v1068, 32
  %v1072 = vpop.permute.xlu0 %1071
  %1074 = vst.msk [vmem:[#allocation4 + $0x8] sm:$0xff] %vm311, %v1072
  %v1076 = vsel %vm305, %v1030, 0
  %1078 = vmatpush.msra.mxu0 0.0
  %1079 = vmatpush.msra.mxu0 0.0
  %1080 = vmatpush.msra.mxu0 0.0
  %1081 = vmatpush.msra.mxu0 0.0
  %1082 = vmatpush.msra.mxu0 0.0
  %1083 = vmatpush.msra.mxu0 0.0
  %1084 = vmatpush.msra.mxu0 0.0
  %1085 = vmatpush.msra.mxu0 0.0
  %1086 = vmatpush.msra.mxu0 0.0
  %1087 = vmatpush.msra.mxu0 0.0
  %1088 = vmatpush.msra.mxu0 0.0
  %1089 = vmatpush.msra.mxu0 0.0
  %1090 = vmatpush.msra.mxu0 %v234
  %1091 = vmatpush.msra.mxu0 %v233
  %1092 = vmatpush.msra.mxu0 %v232
  %1093 = vmatpush.msra.mxu0 %v231
  %1094 = vmatmul.f32.gmra.mxu0 %v1076
  %v1095 = vpop.f32.mrf.mxu0
  %v1096 = vadd.f32 0.0, %v1095
  %1097 = vdwg.mxu0
  %v1099 = vsel %vm305, %v1067, 0
  %1101 = vmatpush.msra.mxu0 0.0
  %1102 = vmatpush.msra.mxu0 0.0
  %1103 = vmatpush.msra.mxu0 0.0
  %1104 = vmatpush.msra.mxu0 0.0
  %1105 = vmatpush.msra.mxu0 0.0
  %1106 = vmatpush.msra.mxu0 0.0
  %1107 = vmatpush.msra.mxu0 0.0
  %1108 = vmatpush.msra.mxu0 0.0
  %1109 = vmatpush.msra.mxu0 0.0
  %1110 = vmatpush.msra.mxu0 0.0
  %1111 = vmatpush.msra.mxu0 0.0
  %1112 = vmatpush.msra.mxu0 0.0
  %1113 = vmatpush.msra.mxu0 %v238
  %1114 = vmatpush.msra.mxu0 %v237
  %1115 = vmatpush.msra.mxu0 %v236
  %1116 = vmatpush.msra.mxu0 %v235
  %1117 = vmatmul.f32.gmra.mxu0 %v1099
  %v1118 = vpop.f32.mrf.mxu0
  %v1119 = vadd.f32 0.0, %v1118
  %1120 = vdwg.mxu0
  %v1121 = vld [vmem:[#allocation2 + $0x38] sm:$0xff]
  %v1122 = vld [vmem:[%s1 + $0x38] sm:$0xff]
  %v1123 = vadd.f32 %v1121, %v1096
  %v1124 = vmul.f32 %v1123, 0.5
  %v1125 = vtanh.pop %v1124
  %v1126 = vmul.f32 %v1125, 0.5
  %v1127 = vadd.f32 %v1126, 0.5
  %v1128 = vsub.f32 0.5, %v1126
  %1130 = vrot.lane.b32.xlu0 %v1128, 96
  %v1131 = vpop.permute.xlu0 %1130
  %v1133 = vmul.f32 %v1122, %v1131
  %v1134 = vmul.f32 %v1122, %v1030
  %v1135 = vadd.f32 %v1096, %v374
  %1137 = vrot.lane.b32.xlu0 %v1135, 64
  %v1138 = vpop.permute.xlu0 %1137
  %v1140 = vmul.f32 %v1127, %v1138
  %1142 = vrot.lane.b32.xlu0 %v1140, 64
  %v1143 = vpop.permute.xlu0 %1142
  %v1145 = vadd.f32 %v1121, %v1143
  %v1146 = vtanh.pop %v1145
  %1147 = vrot.lane.b32.xlu0 %v1030, 64
  %v1148 = vpop.permute.xlu0 %1147
  %v1150 = vsub.f32 %v1146, %v1148
  %1152 = vrot.lane.b32.xlu0 %v1150, 64
  %v1153 = vpop.permute.xlu0 %1152
  %v1155 = vmul.f32 %v1133, %v1153
  %v1156 = vadd.f32 %v1134, %v1155
  %v1157 = vld [vmem:[#allocation3] sm:$0xff]
  %v1158 = vld [vmem:[%s1] sm:$0xff]
  %v1159 = vadd.f32 %v1157, %v1119
  %v1160 = vmul.f32 %v1159, 0.5
  %v1161 = vtanh.pop %v1160
  %v1162 = vmul.f32 %v1161, 0.5
  %v1163 = vadd.f32 %v1162, 0.5
  %v1164 = vsub.f32 0.5, %v1162
  %1166 = vrot.lane.b32.xlu0 %v1164, 96
  %v1167 = vpop.permute.xlu0 %1166
  %v1169 = vmul.f32 %v1158, %v1167
  %v1170 = vmul.f32 %v1158, %v1067
  %v1171 = vadd.f32 %v1119, %v414
  %1173 = vrot.lane.b32.xlu0 %v1171, 64
  %v1174 = vpop.permute.xlu0 %1173
  %v1176 = vmul.f32 %v1163, %v1174
  %1178 = vrot.lane.b32.xlu0 %v1176, 64
  %v1179 = vpop.permute.xlu0 %1178
  %v1181 = vadd.f32 %v1157, %v1179
  %v1182 = vtanh.pop %v1181
  %1183 = vrot.lane.b32.xlu0 %v1067, 64
  %v1184 = vpop.permute.xlu0 %1183
  %v1186 = vsub.f32 %v1182, %v1184
  %1188 = vrot.lane.b32.xlu0 %v1186, 64
  %v1189 = vpop.permute.xlu0 %1188
  %v1191 = vmul.f32 %v1169, %v1189
  %v1192 = vadd.f32 %v1170, %v1191
  %1193 = vst.msk [vmem:[#allocation4 + $0x38] sm:$0xff] %vm305, %v1156
  %1195 = vrot.lane.b32.xlu0 %v1192, 32
  %v1196 = vpop.permute.xlu0 %1195
  %1198 = vst.msk [vmem:[#allocation4] sm:$0xff] %vm311, %v1196
  %v1199 = vld [vmem:[#allocation4] sm:$0xff]
  %v1200 = vld [vmem:[#allocation4 + $0x8] sm:$0xff]
  %v1201 = vld [vmem:[#allocation4 + $0x10] sm:$0xff]
  %v1202 = vld [vmem:[#allocation4 + $0x18] sm:$0xff]
  %v1203 = vld [vmem:[#allocation4 + $0x20] sm:$0xff]
  %v1204 = vld [vmem:[#allocation4 + $0x28] sm:$0xff]
  %v1205 = vld [vmem:[#allocation4 + $0x30] sm:$0xff]
  %v1206 = vld [vmem:[#allocation4 + $0x38] sm:$0xff]
  %v1207 = vld [vmem:[%s8] sm:$0xff]
  %v1208 = vld [vmem:[%s8 + $0x8] sm:$0xff]
  %v1209 = vld [vmem:[%s8 + $0x10] sm:$0xff]
  %v1210 = vld [vmem:[%s8 + $0x18] sm:$0xff]
  %v1211 = vld [vmem:[%s8 + $0x20] sm:$0xff]
  %v1212 = vld [vmem:[%s8 + $0x28] sm:$0xff]
  %v1213 = vld [vmem:[%s8 + $0x30] sm:$0xff]
  %v1214 = vld [vmem:[%s8 + $0x38] sm:$0xff]
  %v1215 = vld [vmem:[%s9] sm:$0x1]
  %v1217 = vperm.slane %v1215, 0
  %vm1219 = vcmask 523264
  %v1221 = vsel %vm1219, %v1199, 0
  %v1224 = vsel %vm1219, %v1200, 0
  %v1227 = vsel %vm1219, %v1201, 0
  %v1230 = vsel %vm1219, %v1202, 0
  %v1233 = vsel %vm1219, %v1203, 0
  %v1236 = vsel %vm1219, %v1204, 0
  %v1239 = vsel %vm1219, %v1205, 0
  %v1242 = vsel %vm1219, %v1206, 0
  %1244 = vmatpush.msra.mxu0 0.0
  %1245 = vmatpush.msra.mxu0 0.0
  %1246 = vmatpush.msra.mxu0 0.0
  %1247 = vmatpush.msra.mxu0 0.0
  %1248 = vmatpush.msra.mxu0 0.0
  %1249 = vmatpush.msra.mxu0 0.0
  %1250 = vmatpush.msra.mxu0 0.0
  %1251 = vmatpush.msra.mxu0 0.0
  %1252 = vmatpush.msra.mxu0 %v1214
  %1253 = vmatpush.msra.mxu0 %v1213
  %1254 = vmatpush.msra.mxu0 %v1212
  %1255 = vmatpush.msra.mxu0 %v1211
  %1256 = vmatpush.msra.mxu0 %v1210
  %1257 = vmatpush.msra.mxu0 %v1209
  %1258 = vmatpush.msra.mxu0 %v1208
  %1259 = vmatpush.msra.mxu0 %v1207
  %1260 = vmatmul.f32.gmra.mxu0 %v1221
  %v1261 = vpop.f32.mrf.mxu0
  %v1262 = vadd.f32 %v1217, %v1261
  %1263 = vmatmul.f32.gmra.mxu0 %v1224
  %v1264 = vpop.f32.mrf.mxu0
  %v1265 = vadd.f32 %v1217, %v1264
  %1266 = vmatmul.f32.gmra.mxu0 %v1227
  %v1267 = vpop.f32.mrf.mxu0
  %v1268 = vadd.f32 %v1217, %v1267
  %1269 = vmatmul.f32.gmra.mxu0 %v1230
  %v1270 = vpop.f32.mrf.mxu0
  %v1271 = vadd.f32 %v1217, %v1270
  %1272 = vmatmul.f32.gmra.mxu0 %v1233
  %v1273 = vpop.f32.mrf.mxu0
  %v1274 = vadd.f32 %v1217, %v1273
  %1275 = vmatmul.f32.gmra.mxu0 %v1236
  %v1276 = vpop.f32.mrf.mxu0
  %v1277 = vadd.f32 %v1217, %v1276
  %1278 = vmatmul.f32.gmra.mxu0 %v1239
  %v1279 = vpop.f32.mrf.mxu0
  %v1280 = vadd.f32 %v1217, %v1279
  %1281 = vmatmul.f32.gmra.mxu0 %v1242
  %v1282 = vpop.f32.mrf.mxu0
  %v1283 = vadd.f32 %v1217, %v1282
  %1284 = vdwg.mxu0
  %vm1285 = vcmask 64512
  %1286 = vst.msk [vmem:[%s10] sm:$0xff] %vm1285, %v1262
  %1287 = vst.msk [vmem:[%s10 + $0x8] sm:$0xff] %vm1285, %v1265
  %1288 = vst.msk [vmem:[%s10 + $0x10] sm:$0xff] %vm1285, %v1268
  %1289 = vst.msk [vmem:[%s10 + $0x18] sm:$0xff] %vm1285, %v1271
  %1290 = vst.msk [vmem:[%s10 + $0x20] sm:$0xff] %vm1285, %v1274
  %1291 = vst.msk [vmem:[%s10 + $0x28] sm:$0xff] %vm1285, %v1277
  %1292 = vst.msk [vmem:[%s10 + $0x30] sm:$0xff] %vm1285, %v1280
  %1293 = vst.msk [vmem:[%s10 + $0x38] sm:$0xff] %vm1285, %v1283
  // Predicated region
  $region42: #{tpu_custom_call.1} parent=0 // pred_check
    _
  $region43: #{tpu_custom_call.1} parent=0 // pred_check_branch
    %1295 = sbr.rel (0) target = $region45
  $region44: #{tpu_custom_call.1} parent=0 // pred_region
    _
  $region45: #{tpu_custom_call.1} parent=0 // pred_fallthru
    _
  // Predicated region
  $region46: #{tpu_custom_call.1} parent=0 // pred_check
    _
  $region47: #{tpu_custom_call.1} parent=0 // pred_check_branch
    %1297 = sbr.rel (0) target = $region49
  $region48: #{tpu_custom_call.1} parent=0 // pred_region
    _
  $region49: #{tpu_custom_call.1} parent=0 // pred_fallthru
    _

</llo_original>
